<compile_context>
chip_gen: v7x
topology: tpu7x:2x2x1
jax: 0.10.0
libtpu: 0.0.40
codegen_flags: <defaults>
</compile_context>

<pallas_src>
import jax
import jax.numpy as jnp
from jax.experimental import pallas as pl
from jax.experimental.pallas import tpu as pltpu

# Synthetic backbone config (mirrors PMModel attributes).
INPUT_SPACE = "BGR"          # exercises the flip branch of _adjust_colorspace
C_IN = 3                     # _adjust_colorspace requires 3 input channels
C_MID = 16
C_OUT = 32                   # -> PMModel.channels

# Lane-dense padded sizes used by the kernel.
K1P = 128                    # 3*3*C_IN + indicator = 28 -> 128
C1P = 128                    # C_MID + indicator lane = 17 -> 128
C2P = 128                    # C_OUT = 32 -> 128
TM = 64                      # output-row tile (M2 = 128 -> 2 parallel grid steps)

IND_K = 3 * 3 * C_IN         # 27: validity-indicator column in the patches / row in w1
IND_C = C_MID                # 16: indicator pass-through lane in the conv1 activation
CENTER_TAP = 4               # (dy=1, dx=1): always spatially valid for 3x3, s2, p1


# ----------------------------------------------------------------------------
# Pallas kernel: fused conv1(3x3,s1)+ReLU -> conv2(3x3,s2)+ReLU
# (all biases, the BGR flip and the spatial-pad mask are folded into w1/w2)
# ----------------------------------------------------------------------------
def _fused_conv_kernel(p1_ref, w1_ref, w2_ref, o_ref):
    # p1_ref : [9, TM, K1P]  bf16  conv1 im2col patches (+validity indicator at
    #                              column 27), one slab per conv2 tap
    # w1_ref : [K1P, C1P]    bf16  conv1 weights; row 27 = b1, w1[27,16] = 1.0
    # w2_ref : [9, C1P, C2P] bf16  per-tap conv2 weights; w2[4,16,:] = b2
    # o_ref  : [TM, C2P]     f32   lane-dense conv2 output tile
    w1 = w1_ref[...]
    acc = jnp.zeros(o_ref.shape, jnp.float32)
    for t in range(9):                                   # static, unrolled
        h = jnp.maximum(
            jnp.dot(p1_ref[t], w1, preferred_element_type=jnp.float32), 0.0)
        acc = acc + jnp.dot(h.astype(jnp.bfloat16), w2_ref[t],
                            preferred_element_type=jnp.float32)
    o_ref[...] = jnp.maximum(acc, 0.0).astype(o_ref.dtype)


# ----------------------------------------------------------------------------
# Plain-JAX glue: im2col, stride-2 tap expansion, param packing
# ----------------------------------------------------------------------------
def _im2col_s1(x_nhwc):
    """3x3, stride 1, pad 1 -> [N, H, W, 9*C], tap-major (ky,kx), channel-minor."""
    N, H, W, C = x_nhwc.shape
    xp = jnp.pad(x_nhwc, ((0, 0), (1, 1), (1, 1), (0, 0)))
    taps = [xp[:, ky:ky + H, kx:kx + W, :] for ky in range(3) for kx in range(3)]
    return jnp.concatenate(taps, axis=-1)                # [N, H, W, 9*C]


def _expand_for_stride2(p1_aug):
    """Re-index conv1 patches to the rows conv2 (3x3, stride 2, pad 1) needs.

    p1_aug: [N, H, W, K1] conv1 patches with the validity indicator appended.
    Returns p1e [9, M2, K1P] (zero-padded K) and (N, Ho, Wo).
    """
    N, H, W, K1 = p1_aug.shape
    Ho = (H + 2 - 3) // 2 + 1
    Wo = (W + 2 - 3) // 2 + 1
    pp = jnp.pad(p1_aug, ((0, 0), (1, 1), (1, 1), (0, 0)))
    taps = [pp[:, dy:dy + 2 * Ho:2, dx:dx + 2 * Wo:2, :].reshape(N * Ho * Wo, K1)
            for dy in range(3) for dx in range(3)]
    p1e = jnp.stack(taps)                                # [9, M2, K1]
    p1e = jnp.pad(p1e, ((0, 0), (0, 0), (0, K1P - K1)))  # lane-dense K
    return p1e, (N, Ho, Wo)


def init_params(key):
    k1, k2, k3, k4 = jax.random.split(key, 4)
    w1 = jax.random.normal(k1, (3, 3, C_IN, C_MID), jnp.float32) / jnp.sqrt(9.0 * C_IN)
    b1 = 0.01 * jax.random.normal(k2, (C_MID,), jnp.float32)
    w2 = jax.random.normal(k3, (3, 3, C_MID, C_OUT), jnp.float32) / jnp.sqrt(9.0 * C_MID)
    b2 = 0.01 * jax.random.normal(k4, (C_OUT,), jnp.float32)
    return {"w1": w1, "b1": b1, "w2": w2, "b2": b2}


def pack_params(params):
    """One-time packing: fold BGR flip, b1, b2 and pad-mask into lane-dense bf16 weights."""
    w1 = params["w1"]
    if INPUT_SPACE == "BGR":
        w1 = w1[:, :, ::-1, :]                           # flip input-channel axis once
    kh, kw, cin, cmid = w1.shape
    w1f = w1.reshape(kh * kw * cin, cmid)
    w1p = jnp.zeros((K1P, C1P), jnp.float32)
    w1p = w1p.at[:kh * kw * cin, :cmid].set(w1f)
    w1p = w1p.at[IND_K, :cmid].set(params["b1"])         # indicator row carries b1
    w1p = w1p.at[IND_K, IND_C].set(1.0)                  # pass validity through lane 16

    w2 = params["w2"]                                    # [3, 3, C_MID, C_OUT]
    cout = w2.shape[-1]
    w2p = jnp.zeros((9, C1P, C2P), jnp.float32)
    w2p = w2p.at[:, :cmid, :cout].set(w2.reshape(9, cmid, cout))
    w2p = w2p.at[CENTER_TAP, IND_C, :cout].set(params["b2"])  # center tap always valid
    return {"w1": w1p.astype(jnp.bfloat16), "w2": w2p.astype(jnp.bfloat16)}


# ----------------------------------------------------------------------------
# Forward
# ----------------------------------------------------------------------------
@jax.jit
def _forward_jit(x_nchw, packed):
    x = jnp.transpose(x_nchw, (0, 2, 3, 1))              # NCHW -> NHWC (flip folded in w1)
    p1 = _im2col_s1(x)                                   # [N, H, W, 27]
    ones = jnp.ones(p1.shape[:-1] + (1,), p1.dtype)      # validity indicator channel
    p1_aug = jnp.concatenate([p1, ones], axis=-1)        # [N, H, W, 28]
    p1e, (N, Ho, Wo) = _expand_for_stride2(p1_aug)       # [9, M2, K1P]
    p1e = p1e.astype(jnp.bfloat16)

    M2 = N * Ho * Wo
    M2p = pl.cdiv(M2, TM) * TM
    if M2p != M2:
        p1e = jnp.pad(p1e, ((0, 0), (0, M2p - M2), (0, 0)))

    out = pl.pallas_call(
        _fused_conv_kernel,
        out_shape=jax.ShapeDtypeStruct((M2p, C2P), jnp.float32),
        grid=(M2p // TM,),
        in_specs=[
            pl.BlockSpec((9, TM, K1P), lambda i: (0, i, 0)),   # patches (per tap)
            pl.BlockSpec((K1P, C1P), lambda i: (0, 0)),        # w1 resident
            pl.BlockSpec((9, C1P, C2P), lambda i: (0, 0, 0)),  # w2 resident
        ],
        out_specs=pl.BlockSpec((TM, C2P), lambda i: (i, 0)),   # lane-dense output
        compiler_params=pltpu.CompilerParams(
            dimension_semantics=("parallel",),
            vmem_limit_bytes=32 << 20),
    )(p1e, packed["w1"], packed["w2"])

    out = out[:M2, :C_OUT].reshape(N, Ho, Wo, C_OUT)
    return jnp.transpose(out, (0, 3, 1, 2))              # NHWC -> NCHW (PyTorch convention)


def pm_model_forward(x_nchw, packed):
    # _adjust_colorspace shape validation (raises like the torch module);
    # the actual BGR flip itself is folded into the packed w1.
    if x_nchw.shape[1] != 3:
        raise ValueError("Bad input shape")
    return _forward_jit(x_nchw, packed)


# ----------------------------------------------------------------------------
# Pure-JAX reference (lax conv, original f32 weights, explicit channel flip)
# ----------------------------------------------------------------------------
def _reference_forward(x_nchw, params):
    x = x_nchw[:, ::-1] if INPUT_SPACE == "BGR" else x_nchw
    x = jnp.transpose(x, (0, 2, 3, 1))
    dn = ("NHWC", "HWIO", "NHWC")
    x = jax.lax.conv_general_dilated(x, params["w1"], (1, 1), ((1, 1), (1, 1)),
                                     dimension_numbers=dn)
    x = jnp.maximum(x + params["b1"], 0.0)
    x = jax.lax.conv_general_dilated(x, params["w2"], (2, 2), ((1, 1), (1, 1)),
                                     dimension_numbers=dn)
    x = jnp.maximum(x + params["b2"], 0.0)
    return jnp.transpose(x, (0, 3, 1, 2))


if __name__ == "__main__":
    key = jax.random.PRNGKey(0)
    kx, kp = jax.random.split(key)
    x = jax.random.normal(kx, (2, 3, 16, 16), jnp.float32)   # NCHW, C must be 3
    params = init_params(kp)
    packed = pack_params(params)

    out = jax.block_until_ready(pm_model_forward(x, packed))
    assert out.shape == (2, C_OUT, 8, 8), out.shape

    ref = jax.block_until_ready(_reference_forward(x, params))
    max_err = float(jnp.max(jnp.abs(out - ref)))
    assert jnp.allclose(out, ref, rtol=3e-2, atol=3e-2), max_err

    print("KERNEL_OK")
</pallas_src>

<mosaic_0001>
module attributes {stable_mosaic.version = 11 : i64} {
  func.func @_fused_conv_kernel(%arg0: i32, %arg1: memref<9x64x128xbf16, #tpu.memory_space<vmem>>, %arg2: memref<128x128xbf16, #tpu.memory_space<vmem>>, %arg3: memref<9x128x128xbf16, #tpu.memory_space<vmem>>, %arg4: memref<64x128xf32, #tpu.memory_space<vmem>>) attributes {dimension_semantics = [#tpu.dimension_semantics<parallel>], iteration_bounds = array<i64: 2>, scalar_prefetch = 0 : i64, scratch_operands = 0 : i64, tpu.core_type = #tpu.core_type<tc>, window_params = [{transform_indices = @transform_0, window_bounds = array<i64: 9, 64, 128>}, {pipeline_mode = #tpu.pipeline_mode<synchronous>, transform_indices = @transform_1, window_bounds = array<i64: 128, 128>}, {pipeline_mode = #tpu.pipeline_mode<synchronous>, transform_indices = @transform_2, window_bounds = array<i64: 9, 128, 128>}, {transform_indices = @transform_3, window_bounds = array<i64: 64, 128>}]} {
    %c0 = arith.constant 0 : index
    %c0_0 = arith.constant 0 : index
    %0 = vector.load %arg2[%c0, %c0_0] : memref<128x128xbf16, #tpu.memory_space<vmem>>, vector<128x128xbf16>
    %cst = arith.constant 0.000000e+00 : f32
    %1 = vector.broadcast %cst : f32 to vector<64x128xf32>
    %c0_1 = arith.constant 0 : index
    %c0_2 = arith.constant 0 : index
    %c0_3 = arith.constant 0 : index
    %2 = vector.load %arg1[%c0_1, %c0_2, %c0_3] : memref<9x64x128xbf16, #tpu.memory_space<vmem>>, vector<1x64x128xbf16>
    %3 = vector.shape_cast %2 : vector<1x64x128xbf16> to vector<64x128xbf16>
    %cst_4 = arith.constant dense<0.000000e+00> : vector<64x128xf32>
    %4 = tpu.matmul %3, %0, %cst_4 {dimension_numbers = #tpu.dot_dimension_numbers<[1], [0], [0], [1], [0, 0, 1, 1], [], []>} : vector<64x128xbf16>, vector<128x128xbf16>, vector<64x128xf32> -> vector<64x128xf32>
    %cst_5 = arith.constant 0.000000e+00 : f32
    %5 = vector.broadcast %cst_5 : f32 to vector<64x128xf32>
    %6 = arith.maximumf %4, %5 : vector<64x128xf32>
    %7 = arith.truncf %6 : vector<64x128xf32> to vector<64x128xbf16>
    %c0_6 = arith.constant 0 : index
    %c0_7 = arith.constant 0 : index
    %c0_8 = arith.constant 0 : index
    %8 = vector.load %arg3[%c0_6, %c0_7, %c0_8] : memref<9x128x128xbf16, #tpu.memory_space<vmem>>, vector<1x128x128xbf16>
    %9 = vector.shape_cast %8 : vector<1x128x128xbf16> to vector<128x128xbf16>
    %cst_9 = arith.constant dense<0.000000e+00> : vector<64x128xf32>
    %10 = tpu.matmul %7, %9, %cst_9 {dimension_numbers = #tpu.dot_dimension_numbers<[1], [0], [0], [1], [0, 0, 1, 1], [], []>} : vector<64x128xbf16>, vector<128x128xbf16>, vector<64x128xf32> -> vector<64x128xf32>
    %11 = arith.addf %1, %10 : vector<64x128xf32>
    %c1 = arith.constant 1 : index
    %c0_10 = arith.constant 0 : index
    %c0_11 = arith.constant 0 : index
    %12 = vector.load %arg1[%c1, %c0_10, %c0_11] : memref<9x64x128xbf16, #tpu.memory_space<vmem>>, vector<1x64x128xbf16>
    %13 = vector.shape_cast %12 : vector<1x64x128xbf16> to vector<64x128xbf16>
    %cst_12 = arith.constant dense<0.000000e+00> : vector<64x128xf32>
    %14 = tpu.matmul %13, %0, %cst_12 {dimension_numbers = #tpu.dot_dimension_numbers<[1], [0], [0], [1], [0, 0, 1, 1], [], []>} : vector<64x128xbf16>, vector<128x128xbf16>, vector<64x128xf32> -> vector<64x128xf32>
    %cst_13 = arith.constant 0.000000e+00 : f32
    %15 = vector.broadcast %cst_13 : f32 to vector<64x128xf32>
    %16 = arith.maximumf %14, %15 : vector<64x128xf32>
    %17 = arith.truncf %16 : vector<64x128xf32> to vector<64x128xbf16>
    %c1_14 = arith.constant 1 : index
    %c0_15 = arith.constant 0 : index
    %c0_16 = arith.constant 0 : index
    %18 = vector.load %arg3[%c1_14, %c0_15, %c0_16] : memref<9x128x128xbf16, #tpu.memory_space<vmem>>, vector<1x128x128xbf16>
    %19 = vector.shape_cast %18 : vector<1x128x128xbf16> to vector<128x128xbf16>
    %cst_17 = arith.constant dense<0.000000e+00> : vector<64x128xf32>
    %20 = tpu.matmul %17, %19, %cst_17 {dimension_numbers = #tpu.dot_dimension_numbers<[1], [0], [0], [1], [0, 0, 1, 1], [], []>} : vector<64x128xbf16>, vector<128x128xbf16>, vector<64x128xf32> -> vector<64x128xf32>
    %21 = arith.addf %11, %20 : vector<64x128xf32>
    %c2 = arith.constant 2 : index
    %c0_18 = arith.constant 0 : index
    %c0_19 = arith.constant 0 : index
    %22 = vector.load %arg1[%c2, %c0_18, %c0_19] : memref<9x64x128xbf16, #tpu.memory_space<vmem>>, vector<1x64x128xbf16>
    %23 = vector.shape_cast %22 : vector<1x64x128xbf16> to vector<64x128xbf16>
    %cst_20 = arith.constant dense<0.000000e+00> : vector<64x128xf32>
    %24 = tpu.matmul %23, %0, %cst_20 {dimension_numbers = #tpu.dot_dimension_numbers<[1], [0], [0], [1], [0, 0, 1, 1], [], []>} : vector<64x128xbf16>, vector<128x128xbf16>, vector<64x128xf32> -> vector<64x128xf32>
    %cst_21 = arith.constant 0.000000e+00 : f32
    %25 = vector.broadcast %cst_21 : f32 to vector<64x128xf32>
    %26 = arith.maximumf %24, %25 : vector<64x128xf32>
    %27 = arith.truncf %26 : vector<64x128xf32> to vector<64x128xbf16>
    %c2_22 = arith.constant 2 : index
    %c0_23 = arith.constant 0 : index
    %c0_24 = arith.constant 0 : index
    %28 = vector.load %arg3[%c2_22, %c0_23, %c0_24] : memref<9x128x128xbf16, #tpu.memory_space<vmem>>, vector<1x128x128xbf16>
    %29 = vector.shape_cast %28 : vector<1x128x128xbf16> to vector<128x128xbf16>
    %cst_25 = arith.constant dense<0.000000e+00> : vector<64x128xf32>
    %30 = tpu.matmul %27, %29, %cst_25 {dimension_numbers = #tpu.dot_dimension_numbers<[1], [0], [0], [1], [0, 0, 1, 1], [], []>} : vector<64x128xbf16>, vector<128x128xbf16>, vector<64x128xf32> -> vector<64x128xf32>
    %31 = arith.addf %21, %30 : vector<64x128xf32>
    %c3 = arith.constant 3 : index
    %c0_26 = arith.constant 0 : index
    %c0_27 = arith.constant 0 : index
    %32 = vector.load %arg1[%c3, %c0_26, %c0_27] : memref<9x64x128xbf16, #tpu.memory_space<vmem>>, vector<1x64x128xbf16>
    %33 = vector.shape_cast %32 : vector<1x64x128xbf16> to vector<64x128xbf16>
    %cst_28 = arith.constant dense<0.000000e+00> : vector<64x128xf32>
    %34 = tpu.matmul %33, %0, %cst_28 {dimension_numbers = #tpu.dot_dimension_numbers<[1], [0], [0], [1], [0, 0, 1, 1], [], []>} : vector<64x128xbf16>, vector<128x128xbf16>, vector<64x128xf32> -> vector<64x128xf32>
    %cst_29 = arith.constant 0.000000e+00 : f32
    %35 = vector.broadcast %cst_29 : f32 to vector<64x128xf32>
    %36 = arith.maximumf %34, %35 : vector<64x128xf32>
    %37 = arith.truncf %36 : vector<64x128xf32> to vector<64x128xbf16>
    %c3_30 = arith.constant 3 : index
    %c0_31 = arith.constant 0 : index
    %c0_32 = arith.constant 0 : index
    %38 = vector.load %arg3[%c3_30, %c0_31, %c0_32] : memref<9x128x128xbf16, #tpu.memory_space<vmem>>, vector<1x128x128xbf16>
    %39 = vector.shape_cast %38 : vector<1x128x128xbf16> to vector<128x128xbf16>
    %cst_33 = arith.constant dense<0.000000e+00> : vector<64x128xf32>
    %40 = tpu.matmul %37, %39, %cst_33 {dimension_numbers = #tpu.dot_dimension_numbers<[1], [0], [0], [1], [0, 0, 1, 1], [], []>} : vector<64x128xbf16>, vector<128x128xbf16>, vector<64x128xf32> -> vector<64x128xf32>
    %41 = arith.addf %31, %40 : vector<64x128xf32>
    %c4 = arith.constant 4 : index
    %c0_34 = arith.constant 0 : index
    %c0_35 = arith.constant 0 : index
    %42 = vector.load %arg1[%c4, %c0_34, %c0_35] : memref<9x64x128xbf16, #tpu.memory_space<vmem>>, vector<1x64x128xbf16>
    %43 = vector.shape_cast %42 : vector<1x64x128xbf16> to vector<64x128xbf16>
    %cst_36 = arith.constant dense<0.000000e+00> : vector<64x128xf32>
    %44 = tpu.matmul %43, %0, %cst_36 {dimension_numbers = #tpu.dot_dimension_numbers<[1], [0], [0], [1], [0, 0, 1, 1], [], []>} : vector<64x128xbf16>, vector<128x128xbf16>, vector<64x128xf32> -> vector<64x128xf32>
    %cst_37 = arith.constant 0.000000e+00 : f32
    %45 = vector.broadcast %cst_37 : f32 to vector<64x128xf32>
    %46 = arith.maximumf %44, %45 : vector<64x128xf32>
    %47 = arith.truncf %46 : vector<64x128xf32> to vector<64x128xbf16>
    %c4_38 = arith.constant 4 : index
    %c0_39 = arith.constant 0 : index
    %c0_40 = arith.constant 0 : index
    %48 = vector.load %arg3[%c4_38, %c0_39, %c0_40] : memref<9x128x128xbf16, #tpu.memory_space<vmem>>, vector<1x128x128xbf16>
    %49 = vector.shape_cast %48 : vector<1x128x128xbf16> to vector<128x128xbf16>
    %cst_41 = arith.constant dense<0.000000e+00> : vector<64x128xf32>
    %50 = tpu.matmul %47, %49, %cst_41 {dimension_numbers = #tpu.dot_dimension_numbers<[1], [0], [0], [1], [0, 0, 1, 1], [], []>} : vector<64x128xbf16>, vector<128x128xbf16>, vector<64x128xf32> -> vector<64x128xf32>
    %51 = arith.addf %41, %50 : vector<64x128xf32>
    %c5 = arith.constant 5 : index
    %c0_42 = arith.constant 0 : index
    %c0_43 = arith.constant 0 : index
    %52 = vector.load %arg1[%c5, %c0_42, %c0_43] : memref<9x64x128xbf16, #tpu.memory_space<vmem>>, vector<1x64x128xbf16>
    %53 = vector.shape_cast %52 : vector<1x64x128xbf16> to vector<64x128xbf16>
    %cst_44 = arith.constant dense<0.000000e+00> : vector<64x128xf32>
    %54 = tpu.matmul %53, %0, %cst_44 {dimension_numbers = #tpu.dot_dimension_numbers<[1], [0], [0], [1], [0, 0, 1, 1], [], []>} : vector<64x128xbf16>, vector<128x128xbf16>, vector<64x128xf32> -> vector<64x128xf32>
    %cst_45 = arith.constant 0.000000e+00 : f32
    %55 = vector.broadcast %cst_45 : f32 to vector<64x128xf32>
    %56 = arith.maximumf %54, %55 : vector<64x128xf32>
    %57 = arith.truncf %56 : vector<64x128xf32> to vector<64x128xbf16>
    %c5_46 = arith.constant 5 : index
    %c0_47 = arith.constant 0 : index
    %c0_48 = arith.constant 0 : index
    %58 = vector.load %arg3[%c5_46, %c0_47, %c0_48] : memref<9x128x128xbf16, #tpu.memory_space<vmem>>, vector<1x128x128xbf16>
    %59 = vector.shape_cast %58 : vector<1x128x128xbf16> to vector<128x128xbf16>
    %cst_49 = arith.constant dense<0.000000e+00> : vector<64x128xf32>
    %60 = tpu.matmul %57, %59, %cst_49 {dimension_numbers = #tpu.dot_dimension_numbers<[1], [0], [0], [1], [0, 0, 1, 1], [], []>} : vector<64x128xbf16>, vector<128x128xbf16>, vector<64x128xf32> -> vector<64x128xf32>
    %61 = arith.addf %51, %60 : vector<64x128xf32>
    %c6 = arith.constant 6 : index
    %c0_50 = arith.constant 0 : index
    %c0_51 = arith.constant 0 : index
    %62 = vector.load %arg1[%c6, %c0_50, %c0_51] : memref<9x64x128xbf16, #tpu.memory_space<vmem>>, vector<1x64x128xbf16>
    %63 = vector.shape_cast %62 : vector<1x64x128xbf16> to vector<64x128xbf16>
    %cst_52 = arith.constant dense<0.000000e+00> : vector<64x128xf32>
    %64 = tpu.matmul %63, %0, %cst_52 {dimension_numbers = #tpu.dot_dimension_numbers<[1], [0], [0], [1], [0, 0, 1, 1], [], []>} : vector<64x128xbf16>, vector<128x128xbf16>, vector<64x128xf32> -> vector<64x128xf32>
    %cst_53 = arith.constant 0.000000e+00 : f32
    %65 = vector.broadcast %cst_53 : f32 to vector<64x128xf32>
    %66 = arith.maximumf %64, %65 : vector<64x128xf32>
    %67 = arith.truncf %66 : vector<64x128xf32> to vector<64x128xbf16>
    %c6_54 = arith.constant 6 : index
    %c0_55 = arith.constant 0 : index
    %c0_56 = arith.constant 0 : index
    %68 = vector.load %arg3[%c6_54, %c0_55, %c0_56] : memref<9x128x128xbf16, #tpu.memory_space<vmem>>, vector<1x128x128xbf16>
    %69 = vector.shape_cast %68 : vector<1x128x128xbf16> to vector<128x128xbf16>
    %cst_57 = arith.constant dense<0.000000e+00> : vector<64x128xf32>
    %70 = tpu.matmul %67, %69, %cst_57 {dimension_numbers = #tpu.dot_dimension_numbers<[1], [0], [0], [1], [0, 0, 1, 1], [], []>} : vector<64x128xbf16>, vector<128x128xbf16>, vector<64x128xf32> -> vector<64x128xf32>
    %71 = arith.addf %61, %70 : vector<64x128xf32>
    %c7 = arith.constant 7 : index
    %c0_58 = arith.constant 0 : index
    %c0_59 = arith.constant 0 : index
    %72 = vector.load %arg1[%c7, %c0_58, %c0_59] : memref<9x64x128xbf16, #tpu.memory_space<vmem>>, vector<1x64x128xbf16>
    %73 = vector.shape_cast %72 : vector<1x64x128xbf16> to vector<64x128xbf16>
    %cst_60 = arith.constant dense<0.000000e+00> : vector<64x128xf32>
    %74 = tpu.matmul %73, %0, %cst_60 {dimension_numbers = #tpu.dot_dimension_numbers<[1], [0], [0], [1], [0, 0, 1, 1], [], []>} : vector<64x128xbf16>, vector<128x128xbf16>, vector<64x128xf32> -> vector<64x128xf32>
    %cst_61 = arith.constant 0.000000e+00 : f32
    %75 = vector.broadcast %cst_61 : f32 to vector<64x128xf32>
    %76 = arith.maximumf %74, %75 : vector<64x128xf32>
    %77 = arith.truncf %76 : vector<64x128xf32> to vector<64x128xbf16>
    %c7_62 = arith.constant 7 : index
    %c0_63 = arith.constant 0 : index
    %c0_64 = arith.constant 0 : index
    %78 = vector.load %arg3[%c7_62, %c0_63, %c0_64] : memref<9x128x128xbf16, #tpu.memory_space<vmem>>, vector<1x128x128xbf16>
    %79 = vector.shape_cast %78 : vector<1x128x128xbf16> to vector<128x128xbf16>
    %cst_65 = arith.constant dense<0.000000e+00> : vector<64x128xf32>
    %80 = tpu.matmul %77, %79, %cst_65 {dimension_numbers = #tpu.dot_dimension_numbers<[1], [0], [0], [1], [0, 0, 1, 1], [], []>} : vector<64x128xbf16>, vector<128x128xbf16>, vector<64x128xf32> -> vector<64x128xf32>
    %81 = arith.addf %71, %80 : vector<64x128xf32>
    %c8 = arith.constant 8 : index
    %c0_66 = arith.constant 0 : index
    %c0_67 = arith.constant 0 : index
    %82 = vector.load %arg1[%c8, %c0_66, %c0_67] : memref<9x64x128xbf16, #tpu.memory_space<vmem>>, vector<1x64x128xbf16>
    %83 = vector.shape_cast %82 : vector<1x64x128xbf16> to vector<64x128xbf16>
    %cst_68 = arith.constant dense<0.000000e+00> : vector<64x128xf32>
    %84 = tpu.matmul %83, %0, %cst_68 {dimension_numbers = #tpu.dot_dimension_numbers<[1], [0], [0], [1], [0, 0, 1, 1], [], []>} : vector<64x128xbf16>, vector<128x128xbf16>, vector<64x128xf32> -> vector<64x128xf32>
    %cst_69 = arith.constant 0.000000e+00 : f32
    %85 = vector.broadcast %cst_69 : f32 to vector<64x128xf32>
    %86 = arith.maximumf %84, %85 : vector<64x128xf32>
    %87 = arith.truncf %86 : vector<64x128xf32> to vector<64x128xbf16>
    %c8_70 = arith.constant 8 : index
    %c0_71 = arith.constant 0 : index
    %c0_72 = arith.constant 0 : index
    %88 = vector.load %arg3[%c8_70, %c0_71, %c0_72] : memref<9x128x128xbf16, #tpu.memory_space<vmem>>, vector<1x128x128xbf16>
    %89 = vector.shape_cast %88 : vector<1x128x128xbf16> to vector<128x128xbf16>
    %cst_73 = arith.constant dense<0.000000e+00> : vector<64x128xf32>
    %90 = tpu.matmul %87, %89, %cst_73 {dimension_numbers = #tpu.dot_dimension_numbers<[1], [0], [0], [1], [0, 0, 1, 1], [], []>} : vector<64x128xbf16>, vector<128x128xbf16>, vector<64x128xf32> -> vector<64x128xf32>
    %91 = arith.addf %81, %90 : vector<64x128xf32>
    %cst_74 = arith.constant 0.000000e+00 : f32
    %92 = vector.broadcast %cst_74 : f32 to vector<64x128xf32>
    %93 = arith.maximumf %91, %92 : vector<64x128xf32>
    %c0_75 = arith.constant 0 : index
    %c0_76 = arith.constant 0 : index
    %94 = vector.load %arg4[%c0_75, %c0_76] : memref<64x128xf32, #tpu.memory_space<vmem>>, vector<64x128xf32>
    tpu.vector_store %arg4[%c0_75, %c0_76], %93 {strides = array<i32>} : memref<64x128xf32, #tpu.memory_space<vmem>>, vector<64x128xf32>,
    return
  }
  func.func @transform_0(%arg0: i32) -> (i32, i32, i32) {
    %c0_i32 = arith.constant 0 : i32
    %c0_i32_0 = arith.constant 0 : i32
    %c0_i32_1 = arith.constant 0 : i32
    return %c0_i32, %arg0, %c0_i32_0 : i32, i32, i32
  }
  func.func @transform_1(%arg0: i32) -> (i32, i32) {
    %c0_i32 = arith.constant 0 : i32
    %c0_i32_0 = arith.constant 0 : i32
    %c0_i32_1 = arith.constant 0 : i32
    return %c0_i32, %c0_i32_0 : i32, i32
  }
  func.func @transform_2(%arg0: i32) -> (i32, i32, i32) {
    %c0_i32 = arith.constant 0 : i32
    %c0_i32_0 = arith.constant 0 : i32
    %c0_i32_1 = arith.constant 0 : i32
    %c0_i32_2 = arith.constant 0 : i32
    return %c0_i32, %c0_i32_0, %c0_i32_1 : i32, i32, i32
  }
  func.func @transform_3(%arg0: i32) -> (i32, i32) {
    %c0_i32 = arith.constant 0 : i32
    %c0_i32_0 = arith.constant 0 : i32
    return %arg0, %c0_i32 : i32, i32
  }
}

</mosaic_0001>

<llo_original>
// kernel: _forward_jit.1
$region0: #{_forward_jit.1}
  #allocation0 [shape = 'u32[]', space=smem, size = 0x4, offset = 0x4, fixed_abs, tag = 'smem constant byte address 0x4 - core index']
  #allocation1 [shape = 'u32[144,128]{1,0:T(1,128)}', space=vmem, size = 0x12000, scoped, tag = 'internal scratch']
  %s0 = inlined_call_operand.vmem [shape: bf16[9,128,128], index: 0, kind: input, shape index: {}]
  %s1 = inlined_call_operand.vmem [shape: bf16[128,128], index: 1, kind: input, shape index: {}]
  %s2 = inlined_call_operand.vmem [shape: bf16[9,128,128], index: 2, kind: input, shape index: {}]
  %s3 = inlined_call_operand.hbm [shape: f32[128,128], index: 3, kind: output, shape index: {}]
  %s4 = sld [smem:[#allocation0]]
  $region86: #{_forward_jit.1} parent=0
    _
  %s6 = ssub.s32 1, %s4
  %s7 = scalar_select 0, %s6, %s4
  $region1: #{_forward_jit.1} parent=0
    #allocation2 [shape = 'u8[294912]{0}', space=vmem, size = 0x48000, scoped, tag = 'input window, operand 0']
    #allocation3 [shape = 'u8[65536]{0}', space=vmem, size = 0x10000, scoped, tag = 'output window, operand 0']
    #allocation4 [shape = 's32[2]{0}', space=sflag, size = 0x8, scoped, tag = 'scoped memory for _forward_jit.1']
    %8 = vsyncpa [#allocation4], 0
    %s9 = scalar_lea.sflag [#allocation4], 1
    %10 = vsyncpa %s9, 0
    loop: start=0, step=1, limit=4
    $region2: #{_forward_jit.1} parent=1 // loop_pre_header
      _
    $region3: #{_forward_jit.1} parent=1 // loop_header
      %s12 = sphi 0, %s16
      %p13 = scmp.ge.s32.totalorder %s12, 4
      %s22 = sphi 0, %s24
      %s25 = sphi 0, %s22
      %s26 = sphi 0, %s25
      %s42 = sphi 0, %s26
      %s46 = sphi 0, %s46
      %s48 = sphi 0, %s46
      %s49 = sphi 0, %s48
      %s63 = sphi 0, %s49
      %s67 = sphi 0, %s67
      %s69 = sphi 0, %s67
      %s70 = sphi 0, %s69
      %s84 = sphi 0, %s70
      %s90 = sphi 0, %s92
      %s93 = sphi 0, %s90
      %s94 = sphi 0, %s93
      %s110 = sphi 0, %s94
    $region4: #{_forward_jit.1} parent=1 // loop_header_branch
      %15 = sbr.rel (%p13) target = $region8
    $region5: #{_forward_jit.1} parent=1 // loop_body
      %s17 = ssub.s32 %s12, 1
      %s18 = ssub.s32 %s12, 2
      %s19 = sadd.s32 %s12, 1
      %s20 = ssub.s32 %s12, %s19
      %p21 = scmp.eq.s32.totalorder %s20, 0
      %s23 = sadd.s32 %s22, 1
      %s24 = scalar_select %p21, %s22, %s23
      %p27 = pneg %p21
      %p28 = scmp.eq.s32.totalorder %s12, 1
      %p29 = por %p27, %p28
      %p30 = scmp.ne.s32.totalorder %s22, %s25
      %p31 = scmp.eq.s32.totalorder %s12, 0
      %p32 = por %p30, %p31
      %p33 = scmp.ne.s32.totalorder %s22, %s25
      %p34 = scmp.eq.s32.totalorder %s17, 1
      %p35 = por %p33, %p34
      %p36 = scmp.ne.s32.totalorder %s25, %s26
      %p37 = scmp.eq.s32.totalorder %s17, 0
      %p38 = por %p36, %p37
      %p39 = scmp.ne.s32.totalorder %s25, %s26
      %p40 = scmp.eq.s32.totalorder %s18, 1
      %p41 = por %p39, %p40
      %p43 = scmp.ne.s32.totalorder %s26, %s42
      %p44 = scmp.eq.s32.totalorder %s18, 0
      %p45 = por %p43, %p44
      %s47 = sadd.s32 %s46, 1
      %p50 = scmp.eq.s32.totalorder %s12, 1
      %p51 = scmp.ne.s32.totalorder %s46, %s48
      %p52 = scmp.eq.s32.totalorder %s12, 0
      %p53 = por %p51, %p52
      %p54 = scmp.ne.s32.totalorder %s46, %s48
      %p55 = scmp.eq.s32.totalorder %s17, 1
      %p56 = por %p54, %p55
      %p57 = scmp.ne.s32.totalorder %s48, %s49
      %p58 = scmp.eq.s32.totalorder %s17, 0
      %p59 = por %p57, %p58
      %p60 = scmp.ne.s32.totalorder %s48, %s49
      %p61 = scmp.eq.s32.totalorder %s18, 1
      %p62 = por %p60, %p61
      %p64 = scmp.ne.s32.totalorder %s49, %s63
      %p65 = scmp.eq.s32.totalorder %s18, 0
      %p66 = por %p64, %p65
      %s68 = sadd.s32 %s67, 1
      %p71 = scmp.eq.s32.totalorder %s12, 1
      %p72 = scmp.ne.s32.totalorder %s67, %s69
      %p73 = scmp.eq.s32.totalorder %s12, 0
      %p74 = por %p72, %p73
      %p75 = scmp.ne.s32.totalorder %s67, %s69
      %p76 = scmp.eq.s32.totalorder %s17, 1
      %p77 = por %p75, %p76
      %p78 = scmp.ne.s32.totalorder %s69, %s70
      %p79 = scmp.eq.s32.totalorder %s17, 0
      %p80 = por %p78, %p79
      %p81 = scmp.ne.s32.totalorder %s69, %s70
      %p82 = scmp.eq.s32.totalorder %s18, 1
      %p83 = por %p81, %p82
      %p85 = scmp.ne.s32.totalorder %s70, %s84
      %p86 = scmp.eq.s32.totalorder %s18, 0
      %p87 = por %p85, %p86
      %s88 = ssub.s32 %s12, %s19
      %p89 = scmp.eq.s32.totalorder %s88, 0
      %s91 = sadd.s32 %s90, 1
      %s92 = scalar_select %p89, %s90, %s91
      %p95 = pneg %p89
      %p96 = scmp.eq.s32.totalorder %s12, 1
      %p97 = por %p95, %p96
      %p98 = scmp.ne.s32.totalorder %s90, %s93
      %p99 = scmp.eq.s32.totalorder %s12, 0
      %p100 = por %p98, %p99
      %p101 = scmp.ne.s32.totalorder %s90, %s93
      %p102 = scmp.eq.s32.totalorder %s17, 1
      %p103 = por %p101, %p102
      %p104 = scmp.ne.s32.totalorder %s93, %s94
      %p105 = scmp.eq.s32.totalorder %s17, 0
      %p106 = por %p104, %p105
      %p107 = scmp.ne.s32.totalorder %s93, %s94
      %p108 = scmp.eq.s32.totalorder %s18, 1
      %p109 = por %p107, %p108
      %p111 = scmp.ne.s32.totalorder %s94, %s110
      %p112 = scmp.eq.s32.totalorder %s18, 0
      %p113 = por %p111, %p112
      %p114 = scmp.le.s32.totalorder 1, %s12
      %p115 = scmp.lt.s32.totalorder %s12, 3
      %p116 = pnand %p114, %p115
      %p117 = pneg %p116
      // Predicated region
      $region9: #{_forward_jit.1} parent=5 // pred_check
        _
      $region10: #{_forward_jit.1} parent=5 // pred_check_branch
        %119 = sbr.rel (%p116) target = $region12
      $region11: #{_forward_jit.1} parent=5 // pred_region
        %s120 = ssub.s32 %s12, 1
        // Predicated region
        $region13: #{_forward_jit.1} parent=11 // pred_check
          %p121 = pneg %p59
        $region14: #{_forward_jit.1} parent=11 // pred_check_branch
          %123 = sbr.rel (%p121) target = $region16
        $region15: #{_forward_jit.1} parent=11 // pred_region
          _
        $region16: #{_forward_jit.1} parent=11 // pred_fallthru
          _
        // Predicated region
        $region17: #{_forward_jit.1} parent=11 // pred_check
          %p124 = pneg %p80
        $region18: #{_forward_jit.1} parent=11 // pred_check_branch
          %126 = sbr.rel (%p124) target = $region20
        $region19: #{_forward_jit.1} parent=11 // pred_region
          _
        $region20: #{_forward_jit.1} parent=11 // pred_fallthru
          _
      $region12: #{_forward_jit.1} parent=5 // pred_fallthru
        _
      %p127 = scmp.lt.s32.totalorder %s12, 2
      // Predicated region
      $region21: #{_forward_jit.1} parent=5 // pred_check
        %p128 = pneg %p127
      $region22: #{_forward_jit.1} parent=5 // pred_check_branch
        %130 = sbr.rel (%p128) target = $region24
      $region23: #{_forward_jit.1} parent=5 // pred_region
        // Predicated region
        $region25: #{_forward_jit.1} parent=23 // pred_check
          %p131 = pneg %p32
        $region26: #{_forward_jit.1} parent=23 // pred_check_branch
          %133 = sbr.rel (%p131) target = $region28
        $region27: #{_forward_jit.1} parent=23 // pred_region
          %s134 = sand.u32 %s22, 1
          %s135 = sand.u32 %s22, 1
          %s136 = smul.addr %s135, 288
          %s137 = scalar_lea.vmem [#allocation2], %s136
          %s138 = smul.u32 8, %s12
          %s139 = smul.addr %s138, 4
          %s140 = scalar_lea.vmem %s0, %s139
          // Predicated region
          $region29: #{_forward_jit.1} parent=27 // pred_check
            _
          $region30: #{_forward_jit.1} parent=27 // pred_check_branch
            %142 = sbr.rel (0) target = $region32
          $region31: #{_forward_jit.1} parent=27 // pred_region
            // Predicated region
            $region33: #{_forward_jit.1} parent=31 // pred_check
              _
            $region34: #{_forward_jit.1} parent=31 // pred_check_branch
              %144 = sbr.rel target = $region36
            $region35: #{_forward_jit.1} parent=31 // pred_region
              // Predicated region
              $region48: #{_forward_jit.1} parent=35 // pred_check
                _
              $region49: #{_forward_jit.1} parent=35 // pred_check_branch
                %301 = sbr.rel (0) target = $region51
              $region50: #{_forward_jit.1} parent=35 // pred_region
                loop: start=0, step=1, limit=1
                $region52: #{_forward_jit.1} parent=50 // loop_pre_header
                  _
                $region53: #{_forward_jit.1} parent=50 // loop_header
                  %s303 = sphi 0, %s307
                  %p304 = scmp.ge.s32.totalorder %s303, 1
                  %s308 = sphi %s140, %s140
                  %s309 = sphi %s137, %s137
                $region54: #{_forward_jit.1} parent=50 // loop_header_branch
                  %306 = sbr.rel (%p304) target = $region58
                $region55: #{_forward_jit.1} parent=50 // loop_body
                  _
                $region56: #{_forward_jit.1} parent=50 // loop_footer
                  %s307 = sadd.s32 1, %s303
                $region57: #{_forward_jit.1} parent=50 // loop_footer_branch
                  %302 = sbr.rel target = $region53
                $region58: #{_forward_jit.1} parent=50 // loop_exit
                  _
                loop: start=0, step=1, limit=1
                $region59: #{_forward_jit.1} parent=50 // loop_pre_header
                  _
                $region60: #{_forward_jit.1} parent=50 // loop_header
                  %s312 = sphi 0, %s316
                  %p313 = scmp.ge.s32.totalorder %s312, 1
                  %s317 = sphi %s140, %s140
                  %s318 = sphi %s137, %s137
                $region61: #{_forward_jit.1} parent=50 // loop_header_branch
                  %315 = sbr.rel (%p313) target = $region65
                $region62: #{_forward_jit.1} parent=50 // loop_body
                  %v319 = vld [vmem:[%s317] sm:$0xf]
                  %320 = vst [vmem:[%s318] sm:$0xf] %v319
                  %v321 = vld [vmem:[%s317 + $0x4] sm:$0xf]
                  %322 = vst [vmem:[%s318 + $0x4] sm:$0xf] %v321
                  %v323 = vld [vmem:[%s317 + $0x8] sm:$0xf]
                  %324 = vst [vmem:[%s318 + $0x8] sm:$0xf] %v323
                  %v325 = vld [vmem:[%s317 + $0xc] sm:$0xf]
                  %326 = vst [vmem:[%s318 + $0xc] sm:$0xf] %v325
                  %v327 = vld [vmem:[%s317 + $0x10] sm:$0xf]
                  %328 = vst [vmem:[%s318 + $0x10] sm:$0xf] %v327
                  %v329 = vld [vmem:[%s317 + $0x14] sm:$0xf]
                  %330 = vst [vmem:[%s318 + $0x14] sm:$0xf] %v329
                  %v331 = vld [vmem:[%s317 + $0x18] sm:$0xf]
                  %332 = vst [vmem:[%s318 + $0x18] sm:$0xf] %v331
                  %v333 = vld [vmem:[%s317 + $0x1c] sm:$0xf]
                  %334 = vst [vmem:[%s318 + $0x1c] sm:$0xf] %v333
                  %v335 = vld [vmem:[%s317 + $0x40] sm:$0xf]
                  %336 = vst [vmem:[%s318 + $0x20] sm:$0xf] %v335
                  %v337 = vld [vmem:[%s317 + $0x44] sm:$0xf]
                  %338 = vst [vmem:[%s318 + $0x24] sm:$0xf] %v337
                  %v339 = vld [vmem:[%s317 + $0x48] sm:$0xf]
                  %340 = vst [vmem:[%s318 + $0x28] sm:$0xf] %v339
                  %v341 = vld [vmem:[%s317 + $0x4c] sm:$0xf]
                  %342 = vst [vmem:[%s318 + $0x2c] sm:$0xf] %v341
                  %v343 = vld [vmem:[%s317 + $0x50] sm:$0xf]
                  %344 = vst [vmem:[%s318 + $0x30] sm:$0xf] %v343
                  %v345 = vld [vmem:[%s317 + $0x54] sm:$0xf]
                  %346 = vst [vmem:[%s318 + $0x34] sm:$0xf] %v345
                  %v347 = vld [vmem:[%s317 + $0x58] sm:$0xf]
                  %348 = vst [vmem:[%s318 + $0x38] sm:$0xf] %v347
                  %v349 = vld [vmem:[%s317 + $0x5c] sm:$0xf]
                  %350 = vst [vmem:[%s318 + $0x3c] sm:$0xf] %v349
                  %v351 = vld [vmem:[%s317 + $0x80] sm:$0xf]
                  %352 = vst [vmem:[%s318 + $0x40] sm:$0xf] %v351
                  %v353 = vld [vmem:[%s317 + $0x84] sm:$0xf]
                  %354 = vst [vmem:[%s318 + $0x44] sm:$0xf] %v353
                  %v355 = vld [vmem:[%s317 + $0x88] sm:$0xf]
                  %356 = vst [vmem:[%s318 + $0x48] sm:$0xf] %v355
                  %v357 = vld [vmem:[%s317 + $0x8c] sm:$0xf]
                  %358 = vst [vmem:[%s318 + $0x4c] sm:$0xf] %v357
                  %v359 = vld [vmem:[%s317 + $0x90] sm:$0xf]
                  %360 = vst [vmem:[%s318 + $0x50] sm:$0xf] %v359
                  %v361 = vld [vmem:[%s317 + $0x94] sm:$0xf]
                  %362 = vst [vmem:[%s318 + $0x54] sm:$0xf] %v361
                  %v363 = vld [vmem:[%s317 + $0x98] sm:$0xf]
                  %364 = vst [vmem:[%s318 + $0x58] sm:$0xf] %v363
                  %v365 = vld [vmem:[%s317 + $0x9c] sm:$0xf]
                  %366 = vst [vmem:[%s318 + $0x5c] sm:$0xf] %v365
                  %v367 = vld [vmem:[%s317 + $0xc0] sm:$0xf]
                  %368 = vst [vmem:[%s318 + $0x60] sm:$0xf] %v367
                  %v369 = vld [vmem:[%s317 + $0xc4] sm:$0xf]
                  %370 = vst [vmem:[%s318 + $0x64] sm:$0xf] %v369
                  %v371 = vld [vmem:[%s317 + $0xc8] sm:$0xf]
                  %372 = vst [vmem:[%s318 + $0x68] sm:$0xf] %v371
                  %v373 = vld [vmem:[%s317 + $0xcc] sm:$0xf]
                  %374 = vst [vmem:[%s318 + $0x6c] sm:$0xf] %v373
                  %v375 = vld [vmem:[%s317 + $0xd0] sm:$0xf]
                  %376 = vst [vmem:[%s318 + $0x70] sm:$0xf] %v375
                  %v377 = vld [vmem:[%s317 + $0xd4] sm:$0xf]
                  %378 = vst [vmem:[%s318 + $0x74] sm:$0xf] %v377
                  %v379 = vld [vmem:[%s317 + $0xd8] sm:$0xf]
                  %380 = vst [vmem:[%s318 + $0x78] sm:$0xf] %v379
                  %v381 = vld [vmem:[%s317 + $0xdc] sm:$0xf]
                  %382 = vst [vmem:[%s318 + $0x7c] sm:$0xf] %v381
                  %v383 = vld [vmem:[%s317 + $0x100] sm:$0xf]
                  %384 = vst [vmem:[%s318 + $0x80] sm:$0xf] %v383
                  %v385 = vld [vmem:[%s317 + $0x104] sm:$0xf]
                  %386 = vst [vmem:[%s318 + $0x84] sm:$0xf] %v385
                  %v387 = vld [vmem:[%s317 + $0x108] sm:$0xf]
                  %388 = vst [vmem:[%s318 + $0x88] sm:$0xf] %v387
                  %v389 = vld [vmem:[%s317 + $0x10c] sm:$0xf]
                  %390 = vst [vmem:[%s318 + $0x8c] sm:$0xf] %v389
                  %v391 = vld [vmem:[%s317 + $0x110] sm:$0xf]
                  %392 = vst [vmem:[%s318 + $0x90] sm:$0xf] %v391
                  %v393 = vld [vmem:[%s317 + $0x114] sm:$0xf]
                  %394 = vst [vmem:[%s318 + $0x94] sm:$0xf] %v393
                  %v395 = vld [vmem:[%s317 + $0x118] sm:$0xf]
                  %396 = vst [vmem:[%s318 + $0x98] sm:$0xf] %v395
                  %v397 = vld [vmem:[%s317 + $0x11c] sm:$0xf]
                  %398 = vst [vmem:[%s318 + $0x9c] sm:$0xf] %v397
                  %v399 = vld [vmem:[%s317 + $0x140] sm:$0xf]
                  %400 = vst [vmem:[%s318 + $0xa0] sm:$0xf] %v399
                  %v401 = vld [vmem:[%s317 + $0x144] sm:$0xf]
                  %402 = vst [vmem:[%s318 + $0xa4] sm:$0xf] %v401
                  %v403 = vld [vmem:[%s317 + $0x148] sm:$0xf]
                  %404 = vst [vmem:[%s318 + $0xa8] sm:$0xf] %v403
                  %v405 = vld [vmem:[%s317 + $0x14c] sm:$0xf]
                  %406 = vst [vmem:[%s318 + $0xac] sm:$0xf] %v405
                  %v407 = vld [vmem:[%s317 + $0x150] sm:$0xf]
                  %408 = vst [vmem:[%s318 + $0xb0] sm:$0xf] %v407
                  %v409 = vld [vmem:[%s317 + $0x154] sm:$0xf]
                  %410 = vst [vmem:[%s318 + $0xb4] sm:$0xf] %v409
                  %v411 = vld [vmem:[%s317 + $0x158] sm:$0xf]
                  %412 = vst [vmem:[%s318 + $0xb8] sm:$0xf] %v411
                  %v413 = vld [vmem:[%s317 + $0x15c] sm:$0xf]
                  %414 = vst [vmem:[%s318 + $0xbc] sm:$0xf] %v413
                  %v415 = vld [vmem:[%s317 + $0x180] sm:$0xf]
                  %416 = vst [vmem:[%s318 + $0xc0] sm:$0xf] %v415
                  %v417 = vld [vmem:[%s317 + $0x184] sm:$0xf]
                  %418 = vst [vmem:[%s318 + $0xc4] sm:$0xf] %v417
                  %v419 = vld [vmem:[%s317 + $0x188] sm:$0xf]
                  %420 = vst [vmem:[%s318 + $0xc8] sm:$0xf] %v419
                  %v421 = vld [vmem:[%s317 + $0x18c] sm:$0xf]
                  %422 = vst [vmem:[%s318 + $0xcc] sm:$0xf] %v421
                  %v423 = vld [vmem:[%s317 + $0x190] sm:$0xf]
                  %424 = vst [vmem:[%s318 + $0xd0] sm:$0xf] %v423
                  %v425 = vld [vmem:[%s317 + $0x194] sm:$0xf]
                  %426 = vst [vmem:[%s318 + $0xd4] sm:$0xf] %v425
                  %v427 = vld [vmem:[%s317 + $0x198] sm:$0xf]
                  %428 = vst [vmem:[%s318 + $0xd8] sm:$0xf] %v427
                  %v429 = vld [vmem:[%s317 + $0x19c] sm:$0xf]
                  %430 = vst [vmem:[%s318 + $0xdc] sm:$0xf] %v429
                  %v431 = vld [vmem:[%s317 + $0x1c0] sm:$0xf]
                  %432 = vst [vmem:[%s318 + $0xe0] sm:$0xf] %v431
                  %v433 = vld [vmem:[%s317 + $0x1c4] sm:$0xf]
                  %434 = vst [vmem:[%s318 + $0xe4] sm:$0xf] %v433
                  %v435 = vld [vmem:[%s317 + $0x1c8] sm:$0xf]
                  %436 = vst [vmem:[%s318 + $0xe8] sm:$0xf] %v435
                  %v437 = vld [vmem:[%s317 + $0x1cc] sm:$0xf]
                  %438 = vst [vmem:[%s318 + $0xec] sm:$0xf] %v437
                  %v439 = vld [vmem:[%s317 + $0x1d0] sm:$0xf]
                  %440 = vst [vmem:[%s318 + $0xf0] sm:$0xf] %v439
                  %v441 = vld [vmem:[%s317 + $0x1d4] sm:$0xf]
                  %442 = vst [vmem:[%s318 + $0xf4] sm:$0xf] %v441
                  %v443 = vld [vmem:[%s317 + $0x1d8] sm:$0xf]
                  %444 = vst [vmem:[%s318 + $0xf8] sm:$0xf] %v443
                  %v445 = vld [vmem:[%s317 + $0x1dc] sm:$0xf]
                  %446 = vst [vmem:[%s318 + $0xfc] sm:$0xf] %v445
                  %v447 = vld [vmem:[%s317 + $0x200] sm:$0xf]
                  %448 = vst [vmem:[%s318 + $0x100] sm:$0xf] %v447
                  %v449 = vld [vmem:[%s317 + $0x204] sm:$0xf]
                  %450 = vst [vmem:[%s318 + $0x104] sm:$0xf] %v449
                  %v451 = vld [vmem:[%s317 + $0x208] sm:$0xf]
                  %452 = vst [vmem:[%s318 + $0x108] sm:$0xf] %v451
                  %v453 = vld [vmem:[%s317 + $0x20c] sm:$0xf]
                  %454 = vst [vmem:[%s318 + $0x10c] sm:$0xf] %v453
                  %v455 = vld [vmem:[%s317 + $0x210] sm:$0xf]
                  %456 = vst [vmem:[%s318 + $0x110] sm:$0xf] %v455
                  %v457 = vld [vmem:[%s317 + $0x214] sm:$0xf]
                  %458 = vst [vmem:[%s318 + $0x114] sm:$0xf] %v457
                  %v459 = vld [vmem:[%s317 + $0x218] sm:$0xf]
                  %460 = vst [vmem:[%s318 + $0x118] sm:$0xf] %v459
                  %v461 = vld [vmem:[%s317 + $0x21c] sm:$0xf]
                  %462 = vst [vmem:[%s318 + $0x11c] sm:$0xf] %v461
                $region63: #{_forward_jit.1} parent=50 // loop_footer
                  %s316 = sadd.s32 1, %s312
                $region64: #{_forward_jit.1} parent=50 // loop_footer_branch
                  %311 = sbr.rel target = $region60
                $region65: #{_forward_jit.1} parent=50 // loop_exit
                  _
              $region51: #{_forward_jit.1} parent=35 // pred_fallthru
                _
            $region36: #{_forward_jit.1} parent=31 // pred_fallthru
              _
            // Predicated region
            $region37: #{_forward_jit.1} parent=31 // pred_check
              _
            $region38: #{_forward_jit.1} parent=31 // pred_check_branch
              %146 = sbr.rel (0) target = $region40
            $region39: #{_forward_jit.1} parent=31 // pred_region
              loop: start=0, step=1, limit=1
              $region41: #{_forward_jit.1} parent=39 // loop_pre_header
                _
              $region42: #{_forward_jit.1} parent=39 // loop_header
                %s149 = sphi 0, %s153
                %p150 = scmp.ge.s32.totalorder %s149, 1
                %s154 = sphi %s140, %s140
                %s155 = sphi %s137, %s137
              $region43: #{_forward_jit.1} parent=39 // loop_header_branch
                %152 = sbr.rel (%p150) target = $region47
              $region44: #{_forward_jit.1} parent=39 // loop_body
                %v156 = vld [vmem:[%s154] sm:$0xf]
                %157 = vst [vmem:[%s155] sm:$0xf] %v156
                %v158 = vld [vmem:[%s154 + $0x4] sm:$0xf]
                %159 = vst [vmem:[%s155 + $0x4] sm:$0xf] %v158
                %v160 = vld [vmem:[%s154 + $0x8] sm:$0xf]
                %161 = vst [vmem:[%s155 + $0x8] sm:$0xf] %v160
                %v162 = vld [vmem:[%s154 + $0xc] sm:$0xf]
                %163 = vst [vmem:[%s155 + $0xc] sm:$0xf] %v162
                %v164 = vld [vmem:[%s154 + $0x10] sm:$0xf]
                %165 = vst [vmem:[%s155 + $0x10] sm:$0xf] %v164
                %v166 = vld [vmem:[%s154 + $0x14] sm:$0xf]
                %167 = vst [vmem:[%s155 + $0x14] sm:$0xf] %v166
                %v168 = vld [vmem:[%s154 + $0x18] sm:$0xf]
                %169 = vst [vmem:[%s155 + $0x18] sm:$0xf] %v168
                %v170 = vld [vmem:[%s154 + $0x1c] sm:$0xf]
                %171 = vst [vmem:[%s155 + $0x1c] sm:$0xf] %v170
                %v172 = vld [vmem:[%s154 + $0x40] sm:$0xf]
                %173 = vst [vmem:[%s155 + $0x20] sm:$0xf] %v172
                %v174 = vld [vmem:[%s154 + $0x44] sm:$0xf]
                %175 = vst [vmem:[%s155 + $0x24] sm:$0xf] %v174
                %v176 = vld [vmem:[%s154 + $0x48] sm:$0xf]
                %177 = vst [vmem:[%s155 + $0x28] sm:$0xf] %v176
                %v178 = vld [vmem:[%s154 + $0x4c] sm:$0xf]
                %179 = vst [vmem:[%s155 + $0x2c] sm:$0xf] %v178
                %v180 = vld [vmem:[%s154 + $0x50] sm:$0xf]
                %181 = vst [vmem:[%s155 + $0x30] sm:$0xf] %v180
                %v182 = vld [vmem:[%s154 + $0x54] sm:$0xf]
                %183 = vst [vmem:[%s155 + $0x34] sm:$0xf] %v182
                %v184 = vld [vmem:[%s154 + $0x58] sm:$0xf]
                %185 = vst [vmem:[%s155 + $0x38] sm:$0xf] %v184
                %v186 = vld [vmem:[%s154 + $0x5c] sm:$0xf]
                %187 = vst [vmem:[%s155 + $0x3c] sm:$0xf] %v186
                %v188 = vld [vmem:[%s154 + $0x80] sm:$0xf]
                %189 = vst [vmem:[%s155 + $0x40] sm:$0xf] %v188
                %v190 = vld [vmem:[%s154 + $0x84] sm:$0xf]
                %191 = vst [vmem:[%s155 + $0x44] sm:$0xf] %v190
                %v192 = vld [vmem:[%s154 + $0x88] sm:$0xf]
                %193 = vst [vmem:[%s155 + $0x48] sm:$0xf] %v192
                %v194 = vld [vmem:[%s154 + $0x8c] sm:$0xf]
                %195 = vst [vmem:[%s155 + $0x4c] sm:$0xf] %v194
                %v196 = vld [vmem:[%s154 + $0x90] sm:$0xf]
                %197 = vst [vmem:[%s155 + $0x50] sm:$0xf] %v196
                %v198 = vld [vmem:[%s154 + $0x94] sm:$0xf]
                %199 = vst [vmem:[%s155 + $0x54] sm:$0xf] %v198
                %v200 = vld [vmem:[%s154 + $0x98] sm:$0xf]
                %201 = vst [vmem:[%s155 + $0x58] sm:$0xf] %v200
                %v202 = vld [vmem:[%s154 + $0x9c] sm:$0xf]
                %203 = vst [vmem:[%s155 + $0x5c] sm:$0xf] %v202
                %v204 = vld [vmem:[%s154 + $0xc0] sm:$0xf]
                %205 = vst [vmem:[%s155 + $0x60] sm:$0xf] %v204
                %v206 = vld [vmem:[%s154 + $0xc4] sm:$0xf]
                %207 = vst [vmem:[%s155 + $0x64] sm:$0xf] %v206
                %v208 = vld [vmem:[%s154 + $0xc8] sm:$0xf]
                %209 = vst [vmem:[%s155 + $0x68] sm:$0xf] %v208
                %v210 = vld [vmem:[%s154 + $0xcc] sm:$0xf]
                %211 = vst [vmem:[%s155 + $0x6c] sm:$0xf] %v210
                %v212 = vld [vmem:[%s154 + $0xd0] sm:$0xf]
                %213 = vst [vmem:[%s155 + $0x70] sm:$0xf] %v212
                %v214 = vld [vmem:[%s154 + $0xd4] sm:$0xf]
                %215 = vst [vmem:[%s155 + $0x74] sm:$0xf] %v214
                %v216 = vld [vmem:[%s154 + $0xd8] sm:$0xf]
                %217 = vst [vmem:[%s155 + $0x78] sm:$0xf] %v216
                %v218 = vld [vmem:[%s154 + $0xdc] sm:$0xf]
                %219 = vst [vmem:[%s155 + $0x7c] sm:$0xf] %v218
                %v220 = vld [vmem:[%s154 + $0x100] sm:$0xf]
                %221 = vst [vmem:[%s155 + $0x80] sm:$0xf] %v220
                %v222 = vld [vmem:[%s154 + $0x104] sm:$0xf]
                %223 = vst [vmem:[%s155 + $0x84] sm:$0xf] %v222
                %v224 = vld [vmem:[%s154 + $0x108] sm:$0xf]
                %225 = vst [vmem:[%s155 + $0x88] sm:$0xf] %v224
                %v226 = vld [vmem:[%s154 + $0x10c] sm:$0xf]
                %227 = vst [vmem:[%s155 + $0x8c] sm:$0xf] %v226
                %v228 = vld [vmem:[%s154 + $0x110] sm:$0xf]
                %229 = vst [vmem:[%s155 + $0x90] sm:$0xf] %v228
                %v230 = vld [vmem:[%s154 + $0x114] sm:$0xf]
                %231 = vst [vmem:[%s155 + $0x94] sm:$0xf] %v230
                %v232 = vld [vmem:[%s154 + $0x118] sm:$0xf]
                %233 = vst [vmem:[%s155 + $0x98] sm:$0xf] %v232
                %v234 = vld [vmem:[%s154 + $0x11c] sm:$0xf]
                %235 = vst [vmem:[%s155 + $0x9c] sm:$0xf] %v234
                %v236 = vld [vmem:[%s154 + $0x140] sm:$0xf]
                %237 = vst [vmem:[%s155 + $0xa0] sm:$0xf] %v236
                %v238 = vld [vmem:[%s154 + $0x144] sm:$0xf]
                %239 = vst [vmem:[%s155 + $0xa4] sm:$0xf] %v238
                %v240 = vld [vmem:[%s154 + $0x148] sm:$0xf]
                %241 = vst [vmem:[%s155 + $0xa8] sm:$0xf] %v240
                %v242 = vld [vmem:[%s154 + $0x14c] sm:$0xf]
                %243 = vst [vmem:[%s155 + $0xac] sm:$0xf] %v242
                %v244 = vld [vmem:[%s154 + $0x150] sm:$0xf]
                %245 = vst [vmem:[%s155 + $0xb0] sm:$0xf] %v244
                %v246 = vld [vmem:[%s154 + $0x154] sm:$0xf]
                %247 = vst [vmem:[%s155 + $0xb4] sm:$0xf] %v246
                %v248 = vld [vmem:[%s154 + $0x158] sm:$0xf]
                %249 = vst [vmem:[%s155 + $0xb8] sm:$0xf] %v248
                %v250 = vld [vmem:[%s154 + $0x15c] sm:$0xf]
                %251 = vst [vmem:[%s155 + $0xbc] sm:$0xf] %v250
                %v252 = vld [vmem:[%s154 + $0x180] sm:$0xf]
                %253 = vst [vmem:[%s155 + $0xc0] sm:$0xf] %v252
                %v254 = vld [vmem:[%s154 + $0x184] sm:$0xf]
                %255 = vst [vmem:[%s155 + $0xc4] sm:$0xf] %v254
                %v256 = vld [vmem:[%s154 + $0x188] sm:$0xf]
                %257 = vst [vmem:[%s155 + $0xc8] sm:$0xf] %v256
                %v258 = vld [vmem:[%s154 + $0x18c] sm:$0xf]
                %259 = vst [vmem:[%s155 + $0xcc] sm:$0xf] %v258
                %v260 = vld [vmem:[%s154 + $0x190] sm:$0xf]
                %261 = vst [vmem:[%s155 + $0xd0] sm:$0xf] %v260
                %v262 = vld [vmem:[%s154 + $0x194] sm:$0xf]
                %263 = vst [vmem:[%s155 + $0xd4] sm:$0xf] %v262
                %v264 = vld [vmem:[%s154 + $0x198] sm:$0xf]
                %265 = vst [vmem:[%s155 + $0xd8] sm:$0xf] %v264
                %v266 = vld [vmem:[%s154 + $0x19c] sm:$0xf]
                %267 = vst [vmem:[%s155 + $0xdc] sm:$0xf] %v266
                %v268 = vld [vmem:[%s154 + $0x1c0] sm:$0xf]
                %269 = vst [vmem:[%s155 + $0xe0] sm:$0xf] %v268
                %v270 = vld [vmem:[%s154 + $0x1c4] sm:$0xf]
                %271 = vst [vmem:[%s155 + $0xe4] sm:$0xf] %v270
                %v272 = vld [vmem:[%s154 + $0x1c8] sm:$0xf]
                %273 = vst [vmem:[%s155 + $0xe8] sm:$0xf] %v272
                %v274 = vld [vmem:[%s154 + $0x1cc] sm:$0xf]
                %275 = vst [vmem:[%s155 + $0xec] sm:$0xf] %v274
                %v276 = vld [vmem:[%s154 + $0x1d0] sm:$0xf]
                %277 = vst [vmem:[%s155 + $0xf0] sm:$0xf] %v276
                %v278 = vld [vmem:[%s154 + $0x1d4] sm:$0xf]
                %279 = vst [vmem:[%s155 + $0xf4] sm:$0xf] %v278
                %v280 = vld [vmem:[%s154 + $0x1d8] sm:$0xf]
                %281 = vst [vmem:[%s155 + $0xf8] sm:$0xf] %v280
                %v282 = vld [vmem:[%s154 + $0x1dc] sm:$0xf]
                %283 = vst [vmem:[%s155 + $0xfc] sm:$0xf] %v282
                %v284 = vld [vmem:[%s154 + $0x200] sm:$0xf]
                %285 = vst [vmem:[%s155 + $0x100] sm:$0xf] %v284
                %v286 = vld [vmem:[%s154 + $0x204] sm:$0xf]
                %287 = vst [vmem:[%s155 + $0x104] sm:$0xf] %v286
                %v288 = vld [vmem:[%s154 + $0x208] sm:$0xf]
                %289 = vst [vmem:[%s155 + $0x108] sm:$0xf] %v288
                %v290 = vld [vmem:[%s154 + $0x20c] sm:$0xf]
                %291 = vst [vmem:[%s155 + $0x10c] sm:$0xf] %v290
                %v292 = vld [vmem:[%s154 + $0x210] sm:$0xf]
                %293 = vst [vmem:[%s155 + $0x110] sm:$0xf] %v292
                %v294 = vld [vmem:[%s154 + $0x214] sm:$0xf]
                %295 = vst [vmem:[%s155 + $0x114] sm:$0xf] %v294
                %v296 = vld [vmem:[%s154 + $0x218] sm:$0xf]
                %297 = vst [vmem:[%s155 + $0x118] sm:$0xf] %v296
                %v298 = vld [vmem:[%s154 + $0x21c] sm:$0xf]
                %299 = vst [vmem:[%s155 + $0x11c] sm:$0xf] %v298
              $region45: #{_forward_jit.1} parent=39 // loop_footer
                %s153 = sadd.s32 1, %s149
              $region46: #{_forward_jit.1} parent=39 // loop_footer_branch
                %148 = sbr.rel target = $region42
              $region47: #{_forward_jit.1} parent=39 // loop_exit
                _
            $region40: #{_forward_jit.1} parent=31 // pred_fallthru
              _
          $region32: #{_forward_jit.1} parent=27 // pred_fallthru
            _
          %463 = vnop
        $region28: #{_forward_jit.1} parent=23 // pred_fallthru
          _
      $region24: #{_forward_jit.1} parent=5 // pred_fallthru
        _
      %p464 = scmp.le.s32.totalorder 1, %s12
      %p465 = scmp.lt.s32.totalorder %s12, 3
      %p466 = pnand %p464, %p465
      %p467 = pneg %p466
      // Predicated region
      $region66: #{_forward_jit.1} parent=5 // pred_check
        _
      $region67: #{_forward_jit.1} parent=5 // pred_check_branch
        %469 = sbr.rel (%p466) target = $region69
      $region68: #{_forward_jit.1} parent=5 // pred_region
        %s470 = ssub.s32 %s12, 1
        %s471 = sand.u32 %s25, 1
        %s472 = sand.u32 %s25, 1
        %s473 = smul.addr %s472, 288
        %s474 = scalar_lea.vmem [#allocation2], %s473
        // Predicated region
        $region70: #{_forward_jit.1} parent=68 // pred_check
          %p475 = pneg %p38
        $region71: #{_forward_jit.1} parent=68 // pred_check_branch
          %477 = sbr.rel (%p475) target = $region73
        $region72: #{_forward_jit.1} parent=68 // pred_region
          _
        $region73: #{_forward_jit.1} parent=68 // pred_fallthru
          _
        %s478 = sand.u32 %s25, 1
        %s479 = sand.u32 %s25, 1
        %s480 = smul.addr %s479, 288
        %s481 = scalar_lea.vmem [#allocation2], %s480
        %p482 = pneg %p38
        %p483 = pneg %p35
        %p484 = pneg %p59
        %p485 = pneg %p56
        %p486 = pneg %p80
        %p487 = pneg %p77
        %p488 = pneg %p106
        %p489 = pneg %p103
        %s490 = sand.u32 %s93, 1
        %s491 = scalar_lea.sflag [#allocation4], %s490
        %s492 = sand.u32 %s93, 1
        %s493 = smul.addr %s492, 64
        %s494 = scalar_lea.vmem [#allocation3], %s493
        %s495 = smul.u32 8, %s17
        %s496 = smul.u32 8, %s17
        %v498 = vld [vmem:[%s1] sm:$0xf]
        %v499 = vld [vmem:[%s1 + $0x4] sm:$0xf]
        %v500 = vld [vmem:[%s1 + $0x8] sm:$0xf]
        %v501 = vld [vmem:[%s1 + $0xc] sm:$0xf]
        %v502 = vld [vmem:[%s1 + $0x10] sm:$0xf]
        %v503 = vld [vmem:[%s1 + $0x14] sm:$0xf]
        %v504 = vld [vmem:[%s1 + $0x18] sm:$0xf]
        %v505 = vld [vmem:[%s1 + $0x1c] sm:$0xf]
        %v506 = vld [vmem:[%s1 + $0x20] sm:$0xf]
        %v507 = vld [vmem:[%s1 + $0x24] sm:$0xf]
        %v508 = vld [vmem:[%s1 + $0x28] sm:$0xf]
        %v509 = vld [vmem:[%s1 + $0x2c] sm:$0xf]
        %v510 = vld [vmem:[%s1 + $0x30] sm:$0xf]
        %v511 = vld [vmem:[%s1 + $0x34] sm:$0xf]
        %v512 = vld [vmem:[%s1 + $0x38] sm:$0xf]
        %v513 = vld [vmem:[%s1 + $0x3c] sm:$0xf]
        %v514 = vld [vmem:[%s474] sm:$0xf]
        %v515 = vld [vmem:[%s474 + $0x4] sm:$0xf]
        %v516 = vld [vmem:[%s474 + $0x8] sm:$0xf]
        %v517 = vld [vmem:[%s474 + $0xc] sm:$0xf]
        %v518 = vld [vmem:[%s474 + $0x10] sm:$0xf]
        %v519 = vld [vmem:[%s474 + $0x14] sm:$0xf]
        %v520 = vld [vmem:[%s474 + $0x18] sm:$0xf]
        %v521 = vld [vmem:[%s474 + $0x1c] sm:$0xf]
        %v530 = vunpack.c.l.b16 %v514
        %v531 = vunpack.c.l.b16 %v515
        %v532 = vunpack.c.l.b16 %v516
        %v533 = vunpack.c.l.b16 %v517
        %v534 = vunpack.c.l.b16 %v518
        %v535 = vunpack.c.l.b16 %v519
        %v536 = vunpack.c.l.b16 %v520
        %v537 = vunpack.c.l.b16 %v521
        %v538 = vpack.c.b16 %v531, %v530
        %v539 = vpack.c.b16 %v533, %v532
        %v540 = vpack.c.b16 %v535, %v534
        %v541 = vpack.c.b16 %v537, %v536
        %v562 = vunpack.c.l.b16 %v498
        %v563 = vunpack.c.l.b16 %v499
        %v564 = vunpack.c.l.b16 %v500
        %v565 = vunpack.c.l.b16 %v501
        %v566 = vunpack.c.l.b16 %v502
        %v567 = vunpack.c.l.b16 %v503
        %v568 = vunpack.c.l.b16 %v504
        %v569 = vunpack.c.l.b16 %v505
        %v570 = vunpack.c.l.b16 %v506
        %v571 = vunpack.c.l.b16 %v507
        %v572 = vunpack.c.l.b16 %v508
        %v573 = vunpack.c.l.b16 %v509
        %v574 = vunpack.c.l.b16 %v510
        %v575 = vunpack.c.l.b16 %v511
        %v576 = vunpack.c.l.b16 %v512
        %v577 = vunpack.c.l.b16 %v513
        %v578 = vpack.c.b16 %v563, %v562
        %v579 = vpack.c.b16 %v565, %v564
        %v580 = vpack.c.b16 %v567, %v566
        %v581 = vpack.c.b16 %v569, %v568
        %v582 = vpack.c.b16 %v571, %v570
        %v583 = vpack.c.b16 %v573, %v572
        %v584 = vpack.c.b16 %v575, %v574
        %v585 = vpack.c.b16 %v577, %v576
        %594 = vmatprep.subr.bf16.mxu0 0
        %595 = vmatpush1.bf16.msra.mxu0 %v578
        %596 = vmatprep.subr.bf16.mxu0 0
        %597 = vmatpush1.bf16.msra.mxu0 %v579
        %598 = vmatprep.subr.bf16.mxu0 0
        %599 = vmatpush1.bf16.msra.mxu0 %v580
        %600 = vmatprep.subr.bf16.mxu0 0
        %601 = vmatpush1.bf16.msra.mxu0 %v581
        %602 = vmatprep.subr.bf16.mxu0 0
        %603 = vmatpush1.bf16.msra.mxu0 %v582
        %604 = vmatprep.subr.bf16.mxu0 0
        %605 = vmatpush1.bf16.msra.mxu0 %v583
        %606 = vmatprep.subr.bf16.mxu0 0
        %607 = vmatpush1.bf16.msra.mxu0 %v584
        %608 = vmatprep.subr.bf16.mxu0 0
        %609 = vmatpush1.bf16.msra.mxu0 %v585
        %610 = vmatprep.subr.bf16.mxu0 0
        %611 = vmatpush1.bf16.msra.mxu0 0
        %612 = vmatprep.subr.bf16.mxu0 0
        %613 = vmatpush1.bf16.msra.mxu0 0
        %614 = vmatprep.subr.bf16.mxu0 0
        %615 = vmatpush1.bf16.msra.mxu0 0
        %616 = vmatprep.subr.bf16.mxu0 0
        %617 = vmatpush1.bf16.msra.mxu0 0
        %618 = vmatprep.subr.bf16.mxu0 0
        %619 = vmatpush1.bf16.msra.mxu0 0
        %620 = vmatprep.subr.bf16.mxu0 0
        %621 = vmatpush1.bf16.msra.mxu0 0
        %622 = vmatprep.subr.bf16.mxu0 0
        %623 = vmatpush1.bf16.msra.mxu0 0
        %624 = vmatprep.subr.bf16.mxu0 0
        %625 = vmatpush1.bf16.msra.mxu0 0
        %626 = vmatprep.mubr.bf16.mxu0 0
        %627 = vmatmul.mubr.bf16.gmra.mrb[0].mxu0 %v538
        %v628 = vpop.f32.mrb[0].mxu0
        %v629 = vadd.f32 0.0, %v628
        %v630 = vpop.f32.mrb[0].mxu0
        %v631 = vpop.f32.mrb[0].mxu0
        %v632 = vadd.f32 0.0, %v631
        %v633 = vpop.f32.mrb[0].mxu0
        %634 = vmatprep.mubr.bf16.mxu0 0
        %635 = vmatmul.mubr.bf16.gmra.mrb[0].mxu0 %v539
        %v636 = vpop.f32.mrb[0].mxu0
        %v637 = vadd.f32 0.0, %v636
        %v638 = vpop.f32.mrb[0].mxu0
        %v639 = vpop.f32.mrb[0].mxu0
        %v640 = vadd.f32 0.0, %v639
        %v641 = vpop.f32.mrb[0].mxu0
        %642 = vmatprep.mubr.bf16.mxu0 0
        %643 = vmatmul.mubr.bf16.gmra.mrb[0].mxu0 %v540
        %v644 = vpop.f32.mrb[0].mxu0
        %v645 = vadd.f32 0.0, %v644
        %v646 = vpop.f32.mrb[0].mxu0
        %v647 = vpop.f32.mrb[0].mxu0
        %v648 = vadd.f32 0.0, %v647
        %v649 = vpop.f32.mrb[0].mxu0
        %650 = vmatprep.mubr.bf16.mxu0 0
        %651 = vmatmul.mubr.bf16.gmra.mrb[0].mxu0 %v541
        %v652 = vpop.f32.mrb[0].mxu0
        %v653 = vadd.f32 0.0, %v652
        %v654 = vpop.f32.mrb[0].mxu0
        %v655 = vpop.f32.mrb[0].mxu0
        %v656 = vadd.f32 0.0, %v655
        %v657 = vpop.f32.mrb[0].mxu0
        %658 = vdwg.mxu0
        %v659 = vmax.f32 %v629, 0.0
        %v660 = vmax.f32 %v632, 0.0
        %v661 = vmax.f32 %v637, 0.0
        %v662 = vmax.f32 %v640, 0.0
        %v663 = vmax.f32 %v645, 0.0
        %v664 = vmax.f32 %v648, 0.0
        %v665 = vmax.f32 %v653, 0.0
        %v666 = vmax.f32 %v656, 0.0
        %v667 = vpack.c.bf16 %v660, %v659
        %v668 = vpack.c.bf16 %v662, %v661
        %v669 = vpack.c.bf16 %v664, %v663
        %v670 = vpack.c.bf16 %v666, %v665
        %v671 = vld [vmem:[%s2] sm:$0xf]
        %v672 = vld [vmem:[%s2 + $0x4] sm:$0xf]
        %v673 = vld [vmem:[%s2 + $0x8] sm:$0xf]
        %v674 = vld [vmem:[%s2 + $0xc] sm:$0xf]
        %v675 = vld [vmem:[%s2 + $0x10] sm:$0xf]
        %v676 = vld [vmem:[%s2 + $0x14] sm:$0xf]
        %v677 = vld [vmem:[%s2 + $0x18] sm:$0xf]
        %v678 = vld [vmem:[%s2 + $0x1c] sm:$0xf]
        %v679 = vld [vmem:[%s2 + $0x20] sm:$0xf]
        %v680 = vld [vmem:[%s2 + $0x24] sm:$0xf]
        %v681 = vld [vmem:[%s2 + $0x28] sm:$0xf]
        %v682 = vld [vmem:[%s2 + $0x2c] sm:$0xf]
        %v683 = vld [vmem:[%s2 + $0x30] sm:$0xf]
        %v684 = vld [vmem:[%s2 + $0x34] sm:$0xf]
        %v685 = vld [vmem:[%s2 + $0x38] sm:$0xf]
        %v686 = vld [vmem:[%s2 + $0x3c] sm:$0xf]
        %s687 = scalar_lea.vmem %s474, 32 [#allocation2]
        %v688 = vld [vmem:[%s687] sm:$0xf]
        %v689 = vld [vmem:[%s687 + $0x4] sm:$0xf]
        %v690 = vld [vmem:[%s687 + $0x8] sm:$0xf]
        %v691 = vld [vmem:[%s687 + $0xc] sm:$0xf]
        %v692 = vld [vmem:[%s687 + $0x10] sm:$0xf]
        %v693 = vld [vmem:[%s687 + $0x14] sm:$0xf]
        %v694 = vld [vmem:[%s687 + $0x18] sm:$0xf]
        %v695 = vld [vmem:[%s687 + $0x1c] sm:$0xf]
        %v704 = vunpack.c.l.b16 %v688
        %v705 = vunpack.c.l.b16 %v689
        %v706 = vunpack.c.l.b16 %v690
        %v707 = vunpack.c.l.b16 %v691
        %v708 = vunpack.c.l.b16 %v692
        %v709 = vunpack.c.l.b16 %v693
        %v710 = vunpack.c.l.b16 %v694
        %v711 = vunpack.c.l.b16 %v695
        %v712 = vpack.c.b16 %v705, %v704
        %v713 = vpack.c.b16 %v707, %v706
        %v714 = vpack.c.b16 %v709, %v708
        %v715 = vpack.c.b16 %v711, %v710
        %720 = vmatprep.subr.bf16.mxu0 0
        %721 = vmatpush1.bf16.msra.mxu0 %v578
        %722 = vmatprep.subr.bf16.mxu0 0
        %723 = vmatpush1.bf16.msra.mxu0 %v579
        %724 = vmatprep.subr.bf16.mxu0 0
        %725 = vmatpush1.bf16.msra.mxu0 %v580
        %726 = vmatprep.subr.bf16.mxu0 0
        %727 = vmatpush1.bf16.msra.mxu0 %v581
        %728 = vmatprep.subr.bf16.mxu0 0
        %729 = vmatpush1.bf16.msra.mxu0 %v582
        %730 = vmatprep.subr.bf16.mxu0 0
        %731 = vmatpush1.bf16.msra.mxu0 %v583
        %732 = vmatprep.subr.bf16.mxu0 0
        %733 = vmatpush1.bf16.msra.mxu0 %v584
        %734 = vmatprep.subr.bf16.mxu0 0
        %735 = vmatpush1.bf16.msra.mxu0 %v585
        %736 = vmatprep.subr.bf16.mxu0 0
        %737 = vmatpush1.bf16.msra.mxu0 0
        %738 = vmatprep.subr.bf16.mxu0 0
        %739 = vmatpush1.bf16.msra.mxu0 0
        %740 = vmatprep.subr.bf16.mxu0 0
        %741 = vmatpush1.bf16.msra.mxu0 0
        %742 = vmatprep.subr.bf16.mxu0 0
        %743 = vmatpush1.bf16.msra.mxu0 0
        %744 = vmatprep.subr.bf16.mxu0 0
        %745 = vmatpush1.bf16.msra.mxu0 0
        %746 = vmatprep.subr.bf16.mxu0 0
        %747 = vmatpush1.bf16.msra.mxu0 0
        %748 = vmatprep.subr.bf16.mxu0 0
        %749 = vmatpush1.bf16.msra.mxu0 0
        %750 = vmatprep.subr.bf16.mxu0 0
        %751 = vmatpush1.bf16.msra.mxu0 0
        %752 = vmatprep.mubr.bf16.mxu0 0
        %753 = vmatmul.mubr.bf16.gmra.mrb[0].mxu0 %v712
        %v754 = vpop.f32.mrb[0].mxu0
        %v755 = vadd.f32 0.0, %v754
        %v756 = vpop.f32.mrb[0].mxu0
        %v757 = vpop.f32.mrb[0].mxu0
        %v758 = vadd.f32 0.0, %v757
        %v759 = vpop.f32.mrb[0].mxu0
        %760 = vmatprep.mubr.bf16.mxu0 0
        %761 = vmatmul.mubr.bf16.gmra.mrb[0].mxu0 %v713
        %v762 = vpop.f32.mrb[0].mxu0
        %v763 = vadd.f32 0.0, %v762
        %v764 = vpop.f32.mrb[0].mxu0
        %v765 = vpop.f32.mrb[0].mxu0
        %v766 = vadd.f32 0.0, %v765
        %v767 = vpop.f32.mrb[0].mxu0
        %768 = vmatprep.mubr.bf16.mxu0 0
        %769 = vmatmul.mubr.bf16.gmra.mrb[0].mxu0 %v714
        %v770 = vpop.f32.mrb[0].mxu0
        %v771 = vadd.f32 0.0, %v770
        %v772 = vpop.f32.mrb[0].mxu0
        %v773 = vpop.f32.mrb[0].mxu0
        %v774 = vadd.f32 0.0, %v773
        %v775 = vpop.f32.mrb[0].mxu0
        %776 = vmatprep.mubr.bf16.mxu0 0
        %777 = vmatmul.mubr.bf16.gmra.mrb[0].mxu0 %v715
        %v778 = vpop.f32.mrb[0].mxu0
        %v779 = vadd.f32 0.0, %v778
        %v780 = vpop.f32.mrb[0].mxu0
        %v781 = vpop.f32.mrb[0].mxu0
        %v782 = vadd.f32 0.0, %v781
        %v783 = vpop.f32.mrb[0].mxu0
        %784 = vdwg.mxu0
        %v785 = vmax.f32 %v755, 0.0
        %v786 = vmax.f32 %v758, 0.0
        %v787 = vmax.f32 %v763, 0.0
        %v788 = vmax.f32 %v766, 0.0
        %v789 = vmax.f32 %v771, 0.0
        %v790 = vmax.f32 %v774, 0.0
        %v791 = vmax.f32 %v779, 0.0
        %v792 = vmax.f32 %v782, 0.0
        %v793 = vpack.c.bf16 %v786, %v785
        %v794 = vpack.c.bf16 %v788, %v787
        %v795 = vpack.c.bf16 %v790, %v789
        %v796 = vpack.c.bf16 %v792, %v791
        %s797 = scalar_lea.vmem %s2, 64
        %v798 = vld [vmem:[%s797] sm:$0xf]
        %v799 = vld [vmem:[%s797 + $0x4] sm:$0xf]
        %v800 = vld [vmem:[%s797 + $0x8] sm:$0xf]
        %v801 = vld [vmem:[%s797 + $0xc] sm:$0xf]
        %v802 = vld [vmem:[%s797 + $0x10] sm:$0xf]
        %v803 = vld [vmem:[%s797 + $0x14] sm:$0xf]
        %v804 = vld [vmem:[%s797 + $0x18] sm:$0xf]
        %v805 = vld [vmem:[%s797 + $0x1c] sm:$0xf]
        %v806 = vld [vmem:[%s797 + $0x20] sm:$0xf]
        %v807 = vld [vmem:[%s797 + $0x24] sm:$0xf]
        %v808 = vld [vmem:[%s797 + $0x28] sm:$0xf]
        %v809 = vld [vmem:[%s797 + $0x2c] sm:$0xf]
        %v810 = vld [vmem:[%s797 + $0x30] sm:$0xf]
        %v811 = vld [vmem:[%s797 + $0x34] sm:$0xf]
        %v812 = vld [vmem:[%s797 + $0x38] sm:$0xf]
        %v813 = vld [vmem:[%s797 + $0x3c] sm:$0xf]
        %v830 = vunpack.c.l.b16 %v798
        %v831 = vunpack.c.l.b16 %v799
        %v832 = vunpack.c.l.b16 %v800
        %v833 = vunpack.c.l.b16 %v801
        %v834 = vunpack.c.l.b16 %v802
        %v835 = vunpack.c.l.b16 %v803
        %v836 = vunpack.c.l.b16 %v804
        %v837 = vunpack.c.l.b16 %v805
        %v838 = vunpack.c.l.b16 %v806
        %v839 = vunpack.c.l.b16 %v807
        %v840 = vunpack.c.l.b16 %v808
        %v841 = vunpack.c.l.b16 %v809
        %v842 = vunpack.c.l.b16 %v810
        %v843 = vunpack.c.l.b16 %v811
        %v844 = vunpack.c.l.b16 %v812
        %v845 = vunpack.c.l.b16 %v813
        %v846 = vpack.c.b16 %v831, %v830
        %v847 = vpack.c.b16 %v833, %v832
        %v848 = vpack.c.b16 %v835, %v834
        %v849 = vpack.c.b16 %v837, %v836
        %v850 = vpack.c.b16 %v839, %v838
        %v851 = vpack.c.b16 %v841, %v840
        %v852 = vpack.c.b16 %v843, %v842
        %v853 = vpack.c.b16 %v845, %v844
        %862 = vmatprep.subr.bf16.mxu0 0
        %863 = vmatpush1.bf16.msra.mxu0 %v846
        %864 = vmatprep.subr.bf16.mxu0 0
        %865 = vmatpush1.bf16.msra.mxu0 %v847
        %866 = vmatprep.subr.bf16.mxu0 0
        %867 = vmatpush1.bf16.msra.mxu0 %v848
        %868 = vmatprep.subr.bf16.mxu0 0
        %869 = vmatpush1.bf16.msra.mxu0 %v849
        %870 = vmatprep.subr.bf16.mxu0 0
        %871 = vmatpush1.bf16.msra.mxu0 %v850
        %872 = vmatprep.subr.bf16.mxu0 0
        %873 = vmatpush1.bf16.msra.mxu0 %v851
        %874 = vmatprep.subr.bf16.mxu0 0
        %875 = vmatpush1.bf16.msra.mxu0 %v852
        %876 = vmatprep.subr.bf16.mxu0 0
        %877 = vmatpush1.bf16.msra.mxu0 %v853
        %878 = vmatprep.subr.bf16.mxu0 0
        %879 = vmatpush1.bf16.msra.mxu0 0
        %880 = vmatprep.subr.bf16.mxu0 0
        %881 = vmatpush1.bf16.msra.mxu0 0
        %882 = vmatprep.subr.bf16.mxu0 0
        %883 = vmatpush1.bf16.msra.mxu0 0
        %884 = vmatprep.subr.bf16.mxu0 0
        %885 = vmatpush1.bf16.msra.mxu0 0
        %886 = vmatprep.subr.bf16.mxu0 0
        %887 = vmatpush1.bf16.msra.mxu0 0
        %888 = vmatprep.subr.bf16.mxu0 0
        %889 = vmatpush1.bf16.msra.mxu0 0
        %890 = vmatprep.subr.bf16.mxu0 0
        %891 = vmatpush1.bf16.msra.mxu0 0
        %892 = vmatprep.subr.bf16.mxu0 0
        %893 = vmatpush1.bf16.msra.mxu0 0
        %894 = vmatprep.mubr.bf16.mxu0 0
        %895 = vmatmul.mubr.bf16.gmra.mrb[0].mxu0 %v793
        %v896 = vpop.f32.mrb[0].mxu0
        %v897 = vadd.f32 0.0, %v896
        %v898 = vpop.f32.mrb[0].mxu0
        %v899 = vpop.f32.mrb[0].mxu0
        %v900 = vadd.f32 0.0, %v899
        %v901 = vpop.f32.mrb[0].mxu0
        %902 = vmatprep.mubr.bf16.mxu0 0
        %903 = vmatmul.mubr.bf16.gmra.mrb[0].mxu0 %v794
        %v904 = vpop.f32.mrb[0].mxu0
        %v905 = vadd.f32 0.0, %v904
        %v906 = vpop.f32.mrb[0].mxu0
        %v907 = vpop.f32.mrb[0].mxu0
        %v908 = vadd.f32 0.0, %v907
        %v909 = vpop.f32.mrb[0].mxu0
        %910 = vmatprep.mubr.bf16.mxu0 0
        %911 = vmatmul.mubr.bf16.gmra.mrb[0].mxu0 %v795
        %v912 = vpop.f32.mrb[0].mxu0
        %v913 = vadd.f32 0.0, %v912
        %v914 = vpop.f32.mrb[0].mxu0
        %v915 = vpop.f32.mrb[0].mxu0
        %v916 = vadd.f32 0.0, %v915
        %v917 = vpop.f32.mrb[0].mxu0
        %918 = vmatprep.mubr.bf16.mxu0 0
        %919 = vmatmul.mubr.bf16.gmra.mrb[0].mxu0 %v796
        %v920 = vpop.f32.mrb[0].mxu0
        %v921 = vadd.f32 0.0, %v920
        %v922 = vpop.f32.mrb[0].mxu0
        %v923 = vpop.f32.mrb[0].mxu0
        %v924 = vadd.f32 0.0, %v923
        %v925 = vpop.f32.mrb[0].mxu0
        %926 = vdwg.mxu0
        %v943 = vunpack.c.l.b16 %v671
        %v944 = vunpack.c.l.b16 %v672
        %v945 = vunpack.c.l.b16 %v673
        %v946 = vunpack.c.l.b16 %v674
        %v947 = vunpack.c.l.b16 %v675
        %v948 = vunpack.c.l.b16 %v676
        %v949 = vunpack.c.l.b16 %v677
        %v950 = vunpack.c.l.b16 %v678
        %v951 = vunpack.c.l.b16 %v679
        %v952 = vunpack.c.l.b16 %v680
        %v953 = vunpack.c.l.b16 %v681
        %v954 = vunpack.c.l.b16 %v682
        %v955 = vunpack.c.l.b16 %v683
        %v956 = vunpack.c.l.b16 %v684
        %v957 = vunpack.c.l.b16 %v685
        %v958 = vunpack.c.l.b16 %v686
        %v959 = vpack.c.b16 %v944, %v943
        %v960 = vpack.c.b16 %v946, %v945
        %v961 = vpack.c.b16 %v948, %v947
        %v962 = vpack.c.b16 %v950, %v949
        %v963 = vpack.c.b16 %v952, %v951
        %v964 = vpack.c.b16 %v954, %v953
        %v965 = vpack.c.b16 %v956, %v955
        %v966 = vpack.c.b16 %v958, %v957
        %975 = vmatprep.subr.bf16.mxu0 0
        %976 = vmatpush1.bf16.msra.mxu0 %v959
        %977 = vmatprep.subr.bf16.mxu0 0
        %978 = vmatpush1.bf16.msra.mxu0 %v960
        %979 = vmatprep.subr.bf16.mxu0 0
        %980 = vmatpush1.bf16.msra.mxu0 %v961
        %981 = vmatprep.subr.bf16.mxu0 0
        %982 = vmatpush1.bf16.msra.mxu0 %v962
        %983 = vmatprep.subr.bf16.mxu0 0
        %984 = vmatpush1.bf16.msra.mxu0 %v963
        %985 = vmatprep.subr.bf16.mxu0 0
        %986 = vmatpush1.bf16.msra.mxu0 %v964
        %987 = vmatprep.subr.bf16.mxu0 0
        %988 = vmatpush1.bf16.msra.mxu0 %v965
        %989 = vmatprep.subr.bf16.mxu0 0
        %990 = vmatpush1.bf16.msra.mxu0 %v966
        %991 = vmatprep.subr.bf16.mxu0 0
        %992 = vmatpush1.bf16.msra.mxu0 0
        %993 = vmatprep.subr.bf16.mxu0 0
        %994 = vmatpush1.bf16.msra.mxu0 0
        %995 = vmatprep.subr.bf16.mxu0 0
        %996 = vmatpush1.bf16.msra.mxu0 0
        %997 = vmatprep.subr.bf16.mxu0 0
        %998 = vmatpush1.bf16.msra.mxu0 0
        %999 = vmatprep.subr.bf16.mxu0 0
        %1000 = vmatpush1.bf16.msra.mxu0 0
        %1001 = vmatprep.subr.bf16.mxu0 0
        %1002 = vmatpush1.bf16.msra.mxu0 0
        %1003 = vmatprep.subr.bf16.mxu0 0
        %1004 = vmatpush1.bf16.msra.mxu0 0
        %1005 = vmatprep.subr.bf16.mxu0 0
        %1006 = vmatpush1.bf16.msra.mxu0 0
        %1007 = vmatprep.mubr.bf16.mxu0 0
        %1008 = vmatmul.mubr.bf16.gmra.mrb[0].mxu0 %v667
        %v1009 = vpop.f32.mrb[0].mxu0
        %v1010 = vadd.f32 %v897, %v1009
        %v1011 = vpop.f32.mrb[0].mxu0
        %v1012 = vpop.f32.mrb[0].mxu0
        %v1013 = vadd.f32 %v900, %v1012
        %v1014 = vpop.f32.mrb[0].mxu0
        %1015 = vmatprep.mubr.bf16.mxu0 0
        %1016 = vmatmul.mubr.bf16.gmra.mrb[0].mxu0 %v668
        %v1017 = vpop.f32.mrb[0].mxu0
        %v1018 = vadd.f32 %v905, %v1017
        %v1019 = vpop.f32.mrb[0].mxu0
        %v1020 = vpop.f32.mrb[0].mxu0
        %v1021 = vadd.f32 %v908, %v1020
        %v1022 = vpop.f32.mrb[0].mxu0
        %1023 = vmatprep.mubr.bf16.mxu0 0
        %1024 = vmatmul.mubr.bf16.gmra.mrb[0].mxu0 %v669
        %v1025 = vpop.f32.mrb[0].mxu0
        %v1026 = vadd.f32 %v913, %v1025
        %v1027 = vpop.f32.mrb[0].mxu0
        %v1028 = vpop.f32.mrb[0].mxu0
        %v1029 = vadd.f32 %v916, %v1028
        %v1030 = vpop.f32.mrb[0].mxu0
        %1031 = vmatprep.mubr.bf16.mxu0 0
        %1032 = vmatmul.mubr.bf16.gmra.mrb[0].mxu0 %v670
        %v1033 = vpop.f32.mrb[0].mxu0
        %v1034 = vadd.f32 %v921, %v1033
        %v1035 = vpop.f32.mrb[0].mxu0
        %v1036 = vpop.f32.mrb[0].mxu0
        %v1037 = vadd.f32 %v924, %v1036
        %v1038 = vpop.f32.mrb[0].mxu0
        %1039 = vdwg.mxu0
        %s1040 = scalar_lea.vmem %s474, 64 [#allocation2]
        %v1041 = vld [vmem:[%s1040] sm:$0xf]
        %v1042 = vld [vmem:[%s1040 + $0x4] sm:$0xf]
        %v1043 = vld [vmem:[%s1040 + $0x8] sm:$0xf]
        %v1044 = vld [vmem:[%s1040 + $0xc] sm:$0xf]
        %v1045 = vld [vmem:[%s1040 + $0x10] sm:$0xf]
        %v1046 = vld [vmem:[%s1040 + $0x14] sm:$0xf]
        %v1047 = vld [vmem:[%s1040 + $0x18] sm:$0xf]
        %v1048 = vld [vmem:[%s1040 + $0x1c] sm:$0xf]
        %v1057 = vunpack.c.l.b16 %v1041
        %v1058 = vunpack.c.l.b16 %v1042
        %v1059 = vunpack.c.l.b16 %v1043
        %v1060 = vunpack.c.l.b16 %v1044
        %v1061 = vunpack.c.l.b16 %v1045
        %v1062 = vunpack.c.l.b16 %v1046
        %v1063 = vunpack.c.l.b16 %v1047
        %v1064 = vunpack.c.l.b16 %v1048
        %v1065 = vpack.c.b16 %v1058, %v1057
        %v1066 = vpack.c.b16 %v1060, %v1059
        %v1067 = vpack.c.b16 %v1062, %v1061
        %v1068 = vpack.c.b16 %v1064, %v1063
        %1073 = vmatprep.subr.bf16.mxu0 0
        %1074 = vmatpush1.bf16.msra.mxu0 %v578
        %1075 = vmatprep.subr.bf16.mxu0 0
        %1076 = vmatpush1.bf16.msra.mxu0 %v579
        %1077 = vmatprep.subr.bf16.mxu0 0
        %1078 = vmatpush1.bf16.msra.mxu0 %v580
        %1079 = vmatprep.subr.bf16.mxu0 0
        %1080 = vmatpush1.bf16.msra.mxu0 %v581
        %1081 = vmatprep.subr.bf16.mxu0 0
        %1082 = vmatpush1.bf16.msra.mxu0 %v582
        %1083 = vmatprep.subr.bf16.mxu0 0
        %1084 = vmatpush1.bf16.msra.mxu0 %v583
        %1085 = vmatprep.subr.bf16.mxu0 0
        %1086 = vmatpush1.bf16.msra.mxu0 %v584
        %1087 = vmatprep.subr.bf16.mxu0 0
        %1088 = vmatpush1.bf16.msra.mxu0 %v585
        %1089 = vmatprep.subr.bf16.mxu0 0
        %1090 = vmatpush1.bf16.msra.mxu0 0
        %1091 = vmatprep.subr.bf16.mxu0 0
        %1092 = vmatpush1.bf16.msra.mxu0 0
        %1093 = vmatprep.subr.bf16.mxu0 0
        %1094 = vmatpush1.bf16.msra.mxu0 0
        %1095 = vmatprep.subr.bf16.mxu0 0
        %1096 = vmatpush1.bf16.msra.mxu0 0
        %1097 = vmatprep.subr.bf16.mxu0 0
        %1098 = vmatpush1.bf16.msra.mxu0 0
        %1099 = vmatprep.subr.bf16.mxu0 0
        %1100 = vmatpush1.bf16.msra.mxu0 0
        %1101 = vmatprep.subr.bf16.mxu0 0
        %1102 = vmatpush1.bf16.msra.mxu0 0
        %1103 = vmatprep.subr.bf16.mxu0 0
        %1104 = vmatpush1.bf16.msra.mxu0 0
        %1105 = vmatprep.mubr.bf16.mxu0 0
        %1106 = vmatmul.mubr.bf16.gmra.mrb[0].mxu0 %v1065
        %v1107 = vpop.f32.mrb[0].mxu0
        %v1108 = vadd.f32 0.0, %v1107
        %v1109 = vpop.f32.mrb[0].mxu0
        %v1110 = vpop.f32.mrb[0].mxu0
        %v1111 = vadd.f32 0.0, %v1110
        %v1112 = vpop.f32.mrb[0].mxu0
        %1113 = vmatprep.mubr.bf16.mxu0 0
        %1114 = vmatmul.mubr.bf16.gmra.mrb[0].mxu0 %v1066
        %v1115 = vpop.f32.mrb[0].mxu0
        %v1116 = vadd.f32 0.0, %v1115
        %v1117 = vpop.f32.mrb[0].mxu0
        %v1118 = vpop.f32.mrb[0].mxu0
        %v1119 = vadd.f32 0.0, %v1118
        %v1120 = vpop.f32.mrb[0].mxu0
        %1121 = vmatprep.mubr.bf16.mxu0 0
        %1122 = vmatmul.mubr.bf16.gmra.mrb[0].mxu0 %v1067
        %v1123 = vpop.f32.mrb[0].mxu0
        %v1124 = vadd.f32 0.0, %v1123
        %v1125 = vpop.f32.mrb[0].mxu0
        %v1126 = vpop.f32.mrb[0].mxu0
        %v1127 = vadd.f32 0.0, %v1126
        %v1128 = vpop.f32.mrb[0].mxu0
        %1129 = vmatprep.mubr.bf16.mxu0 0
        %1130 = vmatmul.mubr.bf16.gmra.mrb[0].mxu0 %v1068
        %v1131 = vpop.f32.mrb[0].mxu0
        %v1132 = vadd.f32 0.0, %v1131
        %v1133 = vpop.f32.mrb[0].mxu0
        %v1134 = vpop.f32.mrb[0].mxu0
        %v1135 = vadd.f32 0.0, %v1134
        %v1136 = vpop.f32.mrb[0].mxu0
        %1137 = vdwg.mxu0
        %v1138 = vmax.f32 %v1108, 0.0
        %v1139 = vmax.f32 %v1111, 0.0
        %v1140 = vmax.f32 %v1116, 0.0
        %v1141 = vmax.f32 %v1119, 0.0
        %v1142 = vmax.f32 %v1124, 0.0
        %v1143 = vmax.f32 %v1127, 0.0
        %v1144 = vmax.f32 %v1132, 0.0
        %v1145 = vmax.f32 %v1135, 0.0
        %v1146 = vpack.c.bf16 %v1139, %v1138
        %v1147 = vpack.c.bf16 %v1141, %v1140
        %v1148 = vpack.c.bf16 %v1143, %v1142
        %v1149 = vpack.c.bf16 %v1145, %v1144
        %s1150 = scalar_lea.vmem %s2, 128
        %v1151 = vld [vmem:[%s1150] sm:$0xf]
        %v1152 = vld [vmem:[%s1150 + $0x4] sm:$0xf]
        %v1153 = vld [vmem:[%s1150 + $0x8] sm:$0xf]
        %v1154 = vld [vmem:[%s1150 + $0xc] sm:$0xf]
        %v1155 = vld [vmem:[%s1150 + $0x10] sm:$0xf]
        %v1156 = vld [vmem:[%s1150 + $0x14] sm:$0xf]
        %v1157 = vld [vmem:[%s1150 + $0x18] sm:$0xf]
        %v1158 = vld [vmem:[%s1150 + $0x1c] sm:$0xf]
        %v1159 = vld [vmem:[%s1150 + $0x20] sm:$0xf]
        %v1160 = vld [vmem:[%s1150 + $0x24] sm:$0xf]
        %v1161 = vld [vmem:[%s1150 + $0x28] sm:$0xf]
        %v1162 = vld [vmem:[%s1150 + $0x2c] sm:$0xf]
        %v1163 = vld [vmem:[%s1150 + $0x30] sm:$0xf]
        %v1164 = vld [vmem:[%s1150 + $0x34] sm:$0xf]
        %v1165 = vld [vmem:[%s1150 + $0x38] sm:$0xf]
        %v1166 = vld [vmem:[%s1150 + $0x3c] sm:$0xf]
        %v1183 = vunpack.c.l.b16 %v1151
        %v1184 = vunpack.c.l.b16 %v1152
        %v1185 = vunpack.c.l.b16 %v1153
        %v1186 = vunpack.c.l.b16 %v1154
        %v1187 = vunpack.c.l.b16 %v1155
        %v1188 = vunpack.c.l.b16 %v1156
        %v1189 = vunpack.c.l.b16 %v1157
        %v1190 = vunpack.c.l.b16 %v1158
        %v1191 = vunpack.c.l.b16 %v1159
        %v1192 = vunpack.c.l.b16 %v1160
        %v1193 = vunpack.c.l.b16 %v1161
        %v1194 = vunpack.c.l.b16 %v1162
        %v1195 = vunpack.c.l.b16 %v1163
        %v1196 = vunpack.c.l.b16 %v1164
        %v1197 = vunpack.c.l.b16 %v1165
        %v1198 = vunpack.c.l.b16 %v1166
        %v1199 = vpack.c.b16 %v1184, %v1183
        %v1200 = vpack.c.b16 %v1186, %v1185
        %v1201 = vpack.c.b16 %v1188, %v1187
        %v1202 = vpack.c.b16 %v1190, %v1189
        %v1203 = vpack.c.b16 %v1192, %v1191
        %v1204 = vpack.c.b16 %v1194, %v1193
        %v1205 = vpack.c.b16 %v1196, %v1195
        %v1206 = vpack.c.b16 %v1198, %v1197
        %1215 = vmatprep.subr.bf16.mxu0 0
        %1216 = vmatpush1.bf16.msra.mxu0 %v1199
        %1217 = vmatprep.subr.bf16.mxu0 0
        %1218 = vmatpush1.bf16.msra.mxu0 %v1200
        %1219 = vmatprep.subr.bf16.mxu0 0
        %1220 = vmatpush1.bf16.msra.mxu0 %v1201
        %1221 = vmatprep.subr.bf16.mxu0 0
        %1222 = vmatpush1.bf16.msra.mxu0 %v1202
        %1223 = vmatprep.subr.bf16.mxu0 0
        %1224 = vmatpush1.bf16.msra.mxu0 %v1203
        %1225 = vmatprep.subr.bf16.mxu0 0
        %1226 = vmatpush1.bf16.msra.mxu0 %v1204
        %1227 = vmatprep.subr.bf16.mxu0 0
        %1228 = vmatpush1.bf16.msra.mxu0 %v1205
        %1229 = vmatprep.subr.bf16.mxu0 0
        %1230 = vmatpush1.bf16.msra.mxu0 %v1206
        %1231 = vmatprep.subr.bf16.mxu0 0
        %1232 = vmatpush1.bf16.msra.mxu0 0
        %1233 = vmatprep.subr.bf16.mxu0 0
        %1234 = vmatpush1.bf16.msra.mxu0 0
        %1235 = vmatprep.subr.bf16.mxu0 0
        %1236 = vmatpush1.bf16.msra.mxu0 0
        %1237 = vmatprep.subr.bf16.mxu0 0
        %1238 = vmatpush1.bf16.msra.mxu0 0
        %1239 = vmatprep.subr.bf16.mxu0 0
        %1240 = vmatpush1.bf16.msra.mxu0 0
        %1241 = vmatprep.subr.bf16.mxu0 0
        %1242 = vmatpush1.bf16.msra.mxu0 0
        %1243 = vmatprep.subr.bf16.mxu0 0
        %1244 = vmatpush1.bf16.msra.mxu0 0
        %1245 = vmatprep.subr.bf16.mxu0 0
        %1246 = vmatpush1.bf16.msra.mxu0 0
        %1247 = vmatprep.mubr.bf16.mxu0 0
        %1248 = vmatmul.mubr.bf16.gmra.mrb[0].mxu0 %v1146
        %v1249 = vpop.f32.mrb[0].mxu0
        %v1250 = vadd.f32 0.0, %v1249
        %v1251 = vpop.f32.mrb[0].mxu0
        %v1252 = vpop.f32.mrb[0].mxu0
        %v1253 = vadd.f32 0.0, %v1252
        %v1254 = vpop.f32.mrb[0].mxu0
        %1255 = vmatprep.mubr.bf16.mxu0 0
        %1256 = vmatmul.mubr.bf16.gmra.mrb[0].mxu0 %v1147
        %v1257 = vpop.f32.mrb[0].mxu0
        %v1258 = vadd.f32 0.0, %v1257
        %v1259 = vpop.f32.mrb[0].mxu0
        %v1260 = vpop.f32.mrb[0].mxu0
        %v1261 = vadd.f32 0.0, %v1260
        %v1262 = vpop.f32.mrb[0].mxu0
        %1263 = vmatprep.mubr.bf16.mxu0 0
        %1264 = vmatmul.mubr.bf16.gmra.mrb[0].mxu0 %v1148
        %v1265 = vpop.f32.mrb[0].mxu0
        %v1266 = vadd.f32 0.0, %v1265
        %v1267 = vpop.f32.mrb[0].mxu0
        %v1268 = vpop.f32.mrb[0].mxu0
        %v1269 = vadd.f32 0.0, %v1268
        %v1270 = vpop.f32.mrb[0].mxu0
        %1271 = vmatprep.mubr.bf16.mxu0 0
        %1272 = vmatmul.mubr.bf16.gmra.mrb[0].mxu0 %v1149
        %v1273 = vpop.f32.mrb[0].mxu0
        %v1274 = vadd.f32 0.0, %v1273
        %v1275 = vpop.f32.mrb[0].mxu0
        %v1276 = vpop.f32.mrb[0].mxu0
        %v1277 = vadd.f32 0.0, %v1276
        %v1278 = vpop.f32.mrb[0].mxu0
        %1279 = vdwg.mxu0
        %v1280 = vadd.f32 %v1010, %v1250
        %v1281 = vadd.f32 %v1013, %v1253
        %v1282 = vadd.f32 %v1018, %v1258
        %v1283 = vadd.f32 %v1021, %v1261
        %v1284 = vadd.f32 %v1026, %v1266
        %v1285 = vadd.f32 %v1029, %v1269
        %v1286 = vadd.f32 %v1034, %v1274
        %v1287 = vadd.f32 %v1037, %v1277
        %s1288 = scalar_lea.vmem %s474, 96 [#allocation2]
        %v1289 = vld [vmem:[%s1288] sm:$0xf]
        %v1290 = vld [vmem:[%s1288 + $0x4] sm:$0xf]
        %v1291 = vld [vmem:[%s1288 + $0x8] sm:$0xf]
        %v1292 = vld [vmem:[%s1288 + $0xc] sm:$0xf]
        %v1293 = vld [vmem:[%s1288 + $0x10] sm:$0xf]
        %v1294 = vld [vmem:[%s1288 + $0x14] sm:$0xf]
        %v1295 = vld [vmem:[%s1288 + $0x18] sm:$0xf]
        %v1296 = vld [vmem:[%s1288 + $0x1c] sm:$0xf]
        %v1305 = vunpack.c.l.b16 %v1289
        %v1306 = vunpack.c.l.b16 %v1290
        %v1307 = vunpack.c.l.b16 %v1291
        %v1308 = vunpack.c.l.b16 %v1292
        %v1309 = vunpack.c.l.b16 %v1293
        %v1310 = vunpack.c.l.b16 %v1294
        %v1311 = vunpack.c.l.b16 %v1295
        %v1312 = vunpack.c.l.b16 %v1296
        %v1313 = vpack.c.b16 %v1306, %v1305
        %v1314 = vpack.c.b16 %v1308, %v1307
        %v1315 = vpack.c.b16 %v1310, %v1309
        %v1316 = vpack.c.b16 %v1312, %v1311
        %1321 = vmatprep.subr.bf16.mxu0 0
        %1322 = vmatpush1.bf16.msra.mxu0 %v578
        %1323 = vmatprep.subr.bf16.mxu0 0
        %1324 = vmatpush1.bf16.msra.mxu0 %v579
        %1325 = vmatprep.subr.bf16.mxu0 0
        %1326 = vmatpush1.bf16.msra.mxu0 %v580
        %1327 = vmatprep.subr.bf16.mxu0 0
        %1328 = vmatpush1.bf16.msra.mxu0 %v581
        %1329 = vmatprep.subr.bf16.mxu0 0
        %1330 = vmatpush1.bf16.msra.mxu0 %v582
        %1331 = vmatprep.subr.bf16.mxu0 0
        %1332 = vmatpush1.bf16.msra.mxu0 %v583
        %1333 = vmatprep.subr.bf16.mxu0 0
        %1334 = vmatpush1.bf16.msra.mxu0 %v584
        %1335 = vmatprep.subr.bf16.mxu0 0
        %1336 = vmatpush1.bf16.msra.mxu0 %v585
        %1337 = vmatprep.subr.bf16.mxu0 0
        %1338 = vmatpush1.bf16.msra.mxu0 0
        %1339 = vmatprep.subr.bf16.mxu0 0
        %1340 = vmatpush1.bf16.msra.mxu0 0
        %1341 = vmatprep.subr.bf16.mxu0 0
        %1342 = vmatpush1.bf16.msra.mxu0 0
        %1343 = vmatprep.subr.bf16.mxu0 0
        %1344 = vmatpush1.bf16.msra.mxu0 0
        %1345 = vmatprep.subr.bf16.mxu0 0
        %1346 = vmatpush1.bf16.msra.mxu0 0
        %1347 = vmatprep.subr.bf16.mxu0 0
        %1348 = vmatpush1.bf16.msra.mxu0 0
        %1349 = vmatprep.subr.bf16.mxu0 0
        %1350 = vmatpush1.bf16.msra.mxu0 0
        %1351 = vmatprep.subr.bf16.mxu0 0
        %1352 = vmatpush1.bf16.msra.mxu0 0
        %1353 = vmatprep.mubr.bf16.mxu0 0
        %1354 = vmatmul.mubr.bf16.gmra.mrb[0].mxu0 %v1313
        %v1355 = vpop.f32.mrb[0].mxu0
        %v1356 = vadd.f32 0.0, %v1355
        %v1357 = vpop.f32.mrb[0].mxu0
        %v1358 = vpop.f32.mrb[0].mxu0
        %v1359 = vadd.f32 0.0, %v1358
        %v1360 = vpop.f32.mrb[0].mxu0
        %1361 = vmatprep.mubr.bf16.mxu0 0
        %1362 = vmatmul.mubr.bf16.gmra.mrb[0].mxu0 %v1314
        %v1363 = vpop.f32.mrb[0].mxu0
        %v1364 = vadd.f32 0.0, %v1363
        %v1365 = vpop.f32.mrb[0].mxu0
        %v1366 = vpop.f32.mrb[0].mxu0
        %v1367 = vadd.f32 0.0, %v1366
        %v1368 = vpop.f32.mrb[0].mxu0
        %1369 = vmatprep.mubr.bf16.mxu0 0
        %1370 = vmatmul.mubr.bf16.gmra.mrb[0].mxu0 %v1315
        %v1371 = vpop.f32.mrb[0].mxu0
        %v1372 = vadd.f32 0.0, %v1371
        %v1373 = vpop.f32.mrb[0].mxu0
        %v1374 = vpop.f32.mrb[0].mxu0
        %v1375 = vadd.f32 0.0, %v1374
        %v1376 = vpop.f32.mrb[0].mxu0
        %1377 = vmatprep.mubr.bf16.mxu0 0
        %1378 = vmatmul.mubr.bf16.gmra.mrb[0].mxu0 %v1316
        %v1379 = vpop.f32.mrb[0].mxu0
        %v1380 = vadd.f32 0.0, %v1379
        %v1381 = vpop.f32.mrb[0].mxu0
        %v1382 = vpop.f32.mrb[0].mxu0
        %v1383 = vadd.f32 0.0, %v1382
        %v1384 = vpop.f32.mrb[0].mxu0
        %1385 = vdwg.mxu0
        %v1386 = vmax.f32 %v1356, 0.0
        %v1387 = vmax.f32 %v1359, 0.0
        %v1388 = vmax.f32 %v1364, 0.0
        %v1389 = vmax.f32 %v1367, 0.0
        %v1390 = vmax.f32 %v1372, 0.0
        %v1391 = vmax.f32 %v1375, 0.0
        %v1392 = vmax.f32 %v1380, 0.0
        %v1393 = vmax.f32 %v1383, 0.0
        %v1394 = vpack.c.bf16 %v1387, %v1386
        %v1395 = vpack.c.bf16 %v1389, %v1388
        %v1396 = vpack.c.bf16 %v1391, %v1390
        %v1397 = vpack.c.bf16 %v1393, %v1392
        %s1398 = scalar_lea.vmem %s2, 192
        %v1399 = vld [vmem:[%s1398] sm:$0xf]
        %v1400 = vld [vmem:[%s1398 + $0x4] sm:$0xf]
        %v1401 = vld [vmem:[%s1398 + $0x8] sm:$0xf]
        %v1402 = vld [vmem:[%s1398 + $0xc] sm:$0xf]
        %v1403 = vld [vmem:[%s1398 + $0x10] sm:$0xf]
        %v1404 = vld [vmem:[%s1398 + $0x14] sm:$0xf]
        %v1405 = vld [vmem:[%s1398 + $0x18] sm:$0xf]
        %v1406 = vld [vmem:[%s1398 + $0x1c] sm:$0xf]
        %v1407 = vld [vmem:[%s1398 + $0x20] sm:$0xf]
        %v1408 = vld [vmem:[%s1398 + $0x24] sm:$0xf]
        %v1409 = vld [vmem:[%s1398 + $0x28] sm:$0xf]
        %v1410 = vld [vmem:[%s1398 + $0x2c] sm:$0xf]
        %v1411 = vld [vmem:[%s1398 + $0x30] sm:$0xf]
        %v1412 = vld [vmem:[%s1398 + $0x34] sm:$0xf]
        %v1413 = vld [vmem:[%s1398 + $0x38] sm:$0xf]
        %v1414 = vld [vmem:[%s1398 + $0x3c] sm:$0xf]
        %v1431 = vunpack.c.l.b16 %v1399
        %v1432 = vunpack.c.l.b16 %v1400
        %v1433 = vunpack.c.l.b16 %v1401
        %v1434 = vunpack.c.l.b16 %v1402
        %v1435 = vunpack.c.l.b16 %v1403
        %v1436 = vunpack.c.l.b16 %v1404
        %v1437 = vunpack.c.l.b16 %v1405
        %v1438 = vunpack.c.l.b16 %v1406
        %v1439 = vunpack.c.l.b16 %v1407
        %v1440 = vunpack.c.l.b16 %v1408
        %v1441 = vunpack.c.l.b16 %v1409
        %v1442 = vunpack.c.l.b16 %v1410
        %v1443 = vunpack.c.l.b16 %v1411
        %v1444 = vunpack.c.l.b16 %v1412
        %v1445 = vunpack.c.l.b16 %v1413
        %v1446 = vunpack.c.l.b16 %v1414
        %v1447 = vpack.c.b16 %v1432, %v1431
        %v1448 = vpack.c.b16 %v1434, %v1433
        %v1449 = vpack.c.b16 %v1436, %v1435
        %v1450 = vpack.c.b16 %v1438, %v1437
        %v1451 = vpack.c.b16 %v1440, %v1439
        %v1452 = vpack.c.b16 %v1442, %v1441
        %v1453 = vpack.c.b16 %v1444, %v1443
        %v1454 = vpack.c.b16 %v1446, %v1445
        %1463 = vmatprep.subr.bf16.mxu0 0
        %1464 = vmatpush1.bf16.msra.mxu0 %v1447
        %1465 = vmatprep.subr.bf16.mxu0 0
        %1466 = vmatpush1.bf16.msra.mxu0 %v1448
        %1467 = vmatprep.subr.bf16.mxu0 0
        %1468 = vmatpush1.bf16.msra.mxu0 %v1449
        %1469 = vmatprep.subr.bf16.mxu0 0
        %1470 = vmatpush1.bf16.msra.mxu0 %v1450
        %1471 = vmatprep.subr.bf16.mxu0 0
        %1472 = vmatpush1.bf16.msra.mxu0 %v1451
        %1473 = vmatprep.subr.bf16.mxu0 0
        %1474 = vmatpush1.bf16.msra.mxu0 %v1452
        %1475 = vmatprep.subr.bf16.mxu0 0
        %1476 = vmatpush1.bf16.msra.mxu0 %v1453
        %1477 = vmatprep.subr.bf16.mxu0 0
        %1478 = vmatpush1.bf16.msra.mxu0 %v1454
        %1479 = vmatprep.subr.bf16.mxu0 0
        %1480 = vmatpush1.bf16.msra.mxu0 0
        %1481 = vmatprep.subr.bf16.mxu0 0
        %1482 = vmatpush1.bf16.msra.mxu0 0
        %1483 = vmatprep.subr.bf16.mxu0 0
        %1484 = vmatpush1.bf16.msra.mxu0 0
        %1485 = vmatprep.subr.bf16.mxu0 0
        %1486 = vmatpush1.bf16.msra.mxu0 0
        %1487 = vmatprep.subr.bf16.mxu0 0
        %1488 = vmatpush1.bf16.msra.mxu0 0
        %1489 = vmatprep.subr.bf16.mxu0 0
        %1490 = vmatpush1.bf16.msra.mxu0 0
        %1491 = vmatprep.subr.bf16.mxu0 0
        %1492 = vmatpush1.bf16.msra.mxu0 0
        %1493 = vmatprep.subr.bf16.mxu0 0
        %1494 = vmatpush1.bf16.msra.mxu0 0
        %1495 = vmatprep.mubr.bf16.mxu0 0
        %1496 = vmatmul.mubr.bf16.gmra.mrb[0].mxu0 %v1394
        %v1497 = vpop.f32.mrb[0].mxu0
        %v1498 = vadd.f32 0.0, %v1497
        %v1499 = vpop.f32.mrb[0].mxu0
        %v1500 = vpop.f32.mrb[0].mxu0
        %v1501 = vadd.f32 0.0, %v1500
        %v1502 = vpop.f32.mrb[0].mxu0
        %1503 = vmatprep.mubr.bf16.mxu0 0
        %1504 = vmatmul.mubr.bf16.gmra.mrb[0].mxu0 %v1395
        %v1505 = vpop.f32.mrb[0].mxu0
        %v1506 = vadd.f32 0.0, %v1505
        %v1507 = vpop.f32.mrb[0].mxu0
        %v1508 = vpop.f32.mrb[0].mxu0
        %v1509 = vadd.f32 0.0, %v1508
        %v1510 = vpop.f32.mrb[0].mxu0
        %1511 = vmatprep.mubr.bf16.mxu0 0
        %1512 = vmatmul.mubr.bf16.gmra.mrb[0].mxu0 %v1396
        %v1513 = vpop.f32.mrb[0].mxu0
        %v1514 = vadd.f32 0.0, %v1513
        %v1515 = vpop.f32.mrb[0].mxu0
        %v1516 = vpop.f32.mrb[0].mxu0
        %v1517 = vadd.f32 0.0, %v1516
        %v1518 = vpop.f32.mrb[0].mxu0
        %1519 = vmatprep.mubr.bf16.mxu0 0
        %1520 = vmatmul.mubr.bf16.gmra.mrb[0].mxu0 %v1397
        %v1521 = vpop.f32.mrb[0].mxu0
        %v1522 = vadd.f32 0.0, %v1521
        %v1523 = vpop.f32.mrb[0].mxu0
        %v1524 = vpop.f32.mrb[0].mxu0
        %v1525 = vadd.f32 0.0, %v1524
        %v1526 = vpop.f32.mrb[0].mxu0
        %1527 = vdwg.mxu0
        %v1528 = vadd.f32 %v1280, %v1498
        %v1529 = vadd.f32 %v1281, %v1501
        %v1530 = vadd.f32 %v1282, %v1506
        %v1531 = vadd.f32 %v1283, %v1509
        %v1532 = vadd.f32 %v1284, %v1514
        %v1533 = vadd.f32 %v1285, %v1517
        %v1534 = vadd.f32 %v1286, %v1522
        %v1535 = vadd.f32 %v1287, %v1525
        %s1536 = scalar_lea.vmem %s474, 128 [#allocation2]
        %v1537 = vld [vmem:[%s1536] sm:$0xf]
        %v1538 = vld [vmem:[%s1536 + $0x4] sm:$0xf]
        %v1539 = vld [vmem:[%s1536 + $0x8] sm:$0xf]
        %v1540 = vld [vmem:[%s1536 + $0xc] sm:$0xf]
        %v1541 = vld [vmem:[%s1536 + $0x10] sm:$0xf]
        %v1542 = vld [vmem:[%s1536 + $0x14] sm:$0xf]
        %v1543 = vld [vmem:[%s1536 + $0x18] sm:$0xf]
        %v1544 = vld [vmem:[%s1536 + $0x1c] sm:$0xf]
        %v1553 = vunpack.c.l.b16 %v1537
        %v1554 = vunpack.c.l.b16 %v1538
        %v1555 = vunpack.c.l.b16 %v1539
        %v1556 = vunpack.c.l.b16 %v1540
        %v1557 = vunpack.c.l.b16 %v1541
        %v1558 = vunpack.c.l.b16 %v1542
        %v1559 = vunpack.c.l.b16 %v1543
        %v1560 = vunpack.c.l.b16 %v1544
        %v1561 = vpack.c.b16 %v1554, %v1553
        %v1562 = vpack.c.b16 %v1556, %v1555
        %v1563 = vpack.c.b16 %v1558, %v1557
        %v1564 = vpack.c.b16 %v1560, %v1559
        %1569 = vmatprep.subr.bf16.mxu0 0
        %1570 = vmatpush1.bf16.msra.mxu0 %v578
        %1571 = vmatprep.subr.bf16.mxu0 0
        %1572 = vmatpush1.bf16.msra.mxu0 %v579
        %1573 = vmatprep.subr.bf16.mxu0 0
        %1574 = vmatpush1.bf16.msra.mxu0 %v580
        %1575 = vmatprep.subr.bf16.mxu0 0
        %1576 = vmatpush1.bf16.msra.mxu0 %v581
        %1577 = vmatprep.subr.bf16.mxu0 0
        %1578 = vmatpush1.bf16.msra.mxu0 %v582
        %1579 = vmatprep.subr.bf16.mxu0 0
        %1580 = vmatpush1.bf16.msra.mxu0 %v583
        %1581 = vmatprep.subr.bf16.mxu0 0
        %1582 = vmatpush1.bf16.msra.mxu0 %v584
        %1583 = vmatprep.subr.bf16.mxu0 0
        %1584 = vmatpush1.bf16.msra.mxu0 %v585
        %1585 = vmatprep.subr.bf16.mxu0 0
        %1586 = vmatpush1.bf16.msra.mxu0 0
        %1587 = vmatprep.subr.bf16.mxu0 0
        %1588 = vmatpush1.bf16.msra.mxu0 0
        %1589 = vmatprep.subr.bf16.mxu0 0
        %1590 = vmatpush1.bf16.msra.mxu0 0
        %1591 = vmatprep.subr.bf16.mxu0 0
        %1592 = vmatpush1.bf16.msra.mxu0 0
        %1593 = vmatprep.subr.bf16.mxu0 0
        %1594 = vmatpush1.bf16.msra.mxu0 0
        %1595 = vmatprep.subr.bf16.mxu0 0
        %1596 = vmatpush1.bf16.msra.mxu0 0
        %1597 = vmatprep.subr.bf16.mxu0 0
        %1598 = vmatpush1.bf16.msra.mxu0 0
        %1599 = vmatprep.subr.bf16.mxu0 0
        %1600 = vmatpush1.bf16.msra.mxu0 0
        %1601 = vmatprep.mubr.bf16.mxu0 0
        %1602 = vmatmul.mubr.bf16.gmra.mrb[0].mxu0 %v1561
        %v1603 = vpop.f32.mrb[0].mxu0
        %v1604 = vadd.f32 0.0, %v1603
        %v1605 = vpop.f32.mrb[0].mxu0
        %v1606 = vpop.f32.mrb[0].mxu0
        %v1607 = vadd.f32 0.0, %v1606
        %v1608 = vpop.f32.mrb[0].mxu0
        %1609 = vmatprep.mubr.bf16.mxu0 0
        %1610 = vmatmul.mubr.bf16.gmra.mrb[0].mxu0 %v1562
        %v1611 = vpop.f32.mrb[0].mxu0
        %v1612 = vadd.f32 0.0, %v1611
        %v1613 = vpop.f32.mrb[0].mxu0
        %v1614 = vpop.f32.mrb[0].mxu0
        %v1615 = vadd.f32 0.0, %v1614
        %v1616 = vpop.f32.mrb[0].mxu0
        %1617 = vmatprep.mubr.bf16.mxu0 0
        %1618 = vmatmul.mubr.bf16.gmra.mrb[0].mxu0 %v1563
        %v1619 = vpop.f32.mrb[0].mxu0
        %v1620 = vadd.f32 0.0, %v1619
        %v1621 = vpop.f32.mrb[0].mxu0
        %v1622 = vpop.f32.mrb[0].mxu0
        %v1623 = vadd.f32 0.0, %v1622
        %v1624 = vpop.f32.mrb[0].mxu0
        %1625 = vmatprep.mubr.bf16.mxu0 0
        %1626 = vmatmul.mubr.bf16.gmra.mrb[0].mxu0 %v1564
        %v1627 = vpop.f32.mrb[0].mxu0
        %v1628 = vadd.f32 0.0, %v1627
        %v1629 = vpop.f32.mrb[0].mxu0
        %v1630 = vpop.f32.mrb[0].mxu0
        %v1631 = vadd.f32 0.0, %v1630
        %v1632 = vpop.f32.mrb[0].mxu0
        %1633 = vdwg.mxu0
        %v1634 = vmax.f32 %v1604, 0.0
        %v1635 = vmax.f32 %v1607, 0.0
        %v1636 = vmax.f32 %v1612, 0.0
        %v1637 = vmax.f32 %v1615, 0.0
        %v1638 = vmax.f32 %v1620, 0.0
        %v1639 = vmax.f32 %v1623, 0.0
        %v1640 = vmax.f32 %v1628, 0.0
        %v1641 = vmax.f32 %v1631, 0.0
        %v1642 = vpack.c.bf16 %v1635, %v1634
        %v1643 = vpack.c.bf16 %v1637, %v1636
        %v1644 = vpack.c.bf16 %v1639, %v1638
        %v1645 = vpack.c.bf16 %v1641, %v1640
        %s1646 = scalar_lea.vmem %s2, 256
        %v1647 = vld [vmem:[%s1646] sm:$0xf]
        %v1648 = vld [vmem:[%s1646 + $0x4] sm:$0xf]
        %v1649 = vld [vmem:[%s1646 + $0x8] sm:$0xf]
        %v1650 = vld [vmem:[%s1646 + $0xc] sm:$0xf]
        %v1651 = vld [vmem:[%s1646 + $0x10] sm:$0xf]
        %v1652 = vld [vmem:[%s1646 + $0x14] sm:$0xf]
        %v1653 = vld [vmem:[%s1646 + $0x18] sm:$0xf]
        %v1654 = vld [vmem:[%s1646 + $0x1c] sm:$0xf]
        %v1655 = vld [vmem:[%s1646 + $0x20] sm:$0xf]
        %v1656 = vld [vmem:[%s1646 + $0x24] sm:$0xf]
        %v1657 = vld [vmem:[%s1646 + $0x28] sm:$0xf]
        %v1658 = vld [vmem:[%s1646 + $0x2c] sm:$0xf]
        %v1659 = vld [vmem:[%s1646 + $0x30] sm:$0xf]
        %v1660 = vld [vmem:[%s1646 + $0x34] sm:$0xf]
        %v1661 = vld [vmem:[%s1646 + $0x38] sm:$0xf]
        %v1662 = vld [vmem:[%s1646 + $0x3c] sm:$0xf]
        %v1679 = vunpack.c.l.b16 %v1647
        %v1680 = vunpack.c.l.b16 %v1648
        %v1681 = vunpack.c.l.b16 %v1649
        %v1682 = vunpack.c.l.b16 %v1650
        %v1683 = vunpack.c.l.b16 %v1651
        %v1684 = vunpack.c.l.b16 %v1652
        %v1685 = vunpack.c.l.b16 %v1653
        %v1686 = vunpack.c.l.b16 %v1654
        %v1687 = vunpack.c.l.b16 %v1655
        %v1688 = vunpack.c.l.b16 %v1656
        %v1689 = vunpack.c.l.b16 %v1657
        %v1690 = vunpack.c.l.b16 %v1658
        %v1691 = vunpack.c.l.b16 %v1659
        %v1692 = vunpack.c.l.b16 %v1660
        %v1693 = vunpack.c.l.b16 %v1661
        %v1694 = vunpack.c.l.b16 %v1662
        %v1695 = vpack.c.b16 %v1680, %v1679
        %v1696 = vpack.c.b16 %v1682, %v1681
        %v1697 = vpack.c.b16 %v1684, %v1683
        %v1698 = vpack.c.b16 %v1686, %v1685
        %v1699 = vpack.c.b16 %v1688, %v1687
        %v1700 = vpack.c.b16 %v1690, %v1689
        %v1701 = vpack.c.b16 %v1692, %v1691
        %v1702 = vpack.c.b16 %v1694, %v1693
        %1711 = vmatprep.subr.bf16.mxu0 0
        %1712 = vmatpush1.bf16.msra.mxu0 %v1695
        %1713 = vmatprep.subr.bf16.mxu0 0
        %1714 = vmatpush1.bf16.msra.mxu0 %v1696
        %1715 = vmatprep.subr.bf16.mxu0 0
        %1716 = vmatpush1.bf16.msra.mxu0 %v1697
        %1717 = vmatprep.subr.bf16.mxu0 0
        %1718 = vmatpush1.bf16.msra.mxu0 %v1698
        %1719 = vmatprep.subr.bf16.mxu0 0
        %1720 = vmatpush1.bf16.msra.mxu0 %v1699
        %1721 = vmatprep.subr.bf16.mxu0 0
        %1722 = vmatpush1.bf16.msra.mxu0 %v1700
        %1723 = vmatprep.subr.bf16.mxu0 0
        %1724 = vmatpush1.bf16.msra.mxu0 %v1701
        %1725 = vmatprep.subr.bf16.mxu0 0
        %1726 = vmatpush1.bf16.msra.mxu0 %v1702
        %1727 = vmatprep.subr.bf16.mxu0 0
        %1728 = vmatpush1.bf16.msra.mxu0 0
        %1729 = vmatprep.subr.bf16.mxu0 0
        %1730 = vmatpush1.bf16.msra.mxu0 0
        %1731 = vmatprep.subr.bf16.mxu0 0
        %1732 = vmatpush1.bf16.msra.mxu0 0
        %1733 = vmatprep.subr.bf16.mxu0 0
        %1734 = vmatpush1.bf16.msra.mxu0 0
        %1735 = vmatprep.subr.bf16.mxu0 0
        %1736 = vmatpush1.bf16.msra.mxu0 0
        %1737 = vmatprep.subr.bf16.mxu0 0
        %1738 = vmatpush1.bf16.msra.mxu0 0
        %1739 = vmatprep.subr.bf16.mxu0 0
        %1740 = vmatpush1.bf16.msra.mxu0 0
        %1741 = vmatprep.subr.bf16.mxu0 0
        %1742 = vmatpush1.bf16.msra.mxu0 0
        %1743 = vmatprep.mubr.bf16.mxu0 0
        %1744 = vmatmul.mubr.bf16.gmra.mrb[0].mxu0 %v1642
        %v1745 = vpop.f32.mrb[0].mxu0
        %v1746 = vadd.f32 0.0, %v1745
        %v1747 = vpop.f32.mrb[0].mxu0
        %v1748 = vpop.f32.mrb[0].mxu0
        %v1749 = vadd.f32 0.0, %v1748
        %v1750 = vpop.f32.mrb[0].mxu0
        %1751 = vmatprep.mubr.bf16.mxu0 0
        %1752 = vmatmul.mubr.bf16.gmra.mrb[0].mxu0 %v1643
        %v1753 = vpop.f32.mrb[0].mxu0
        %v1754 = vadd.f32 0.0, %v1753
        %v1755 = vpop.f32.mrb[0].mxu0
        %v1756 = vpop.f32.mrb[0].mxu0
        %v1757 = vadd.f32 0.0, %v1756
        %v1758 = vpop.f32.mrb[0].mxu0
        %1759 = vmatprep.mubr.bf16.mxu0 0
        %1760 = vmatmul.mubr.bf16.gmra.mrb[0].mxu0 %v1644
        %v1761 = vpop.f32.mrb[0].mxu0
        %v1762 = vadd.f32 0.0, %v1761
        %v1763 = vpop.f32.mrb[0].mxu0
        %v1764 = vpop.f32.mrb[0].mxu0
        %v1765 = vadd.f32 0.0, %v1764
        %v1766 = vpop.f32.mrb[0].mxu0
        %1767 = vmatprep.mubr.bf16.mxu0 0
        %1768 = vmatmul.mubr.bf16.gmra.mrb[0].mxu0 %v1645
        %v1769 = vpop.f32.mrb[0].mxu0
        %v1770 = vadd.f32 0.0, %v1769
        %v1771 = vpop.f32.mrb[0].mxu0
        %v1772 = vpop.f32.mrb[0].mxu0
        %v1773 = vadd.f32 0.0, %v1772
        %v1774 = vpop.f32.mrb[0].mxu0
        %1775 = vdwg.mxu0
        %v1776 = vadd.f32 %v1528, %v1746
        %v1777 = vadd.f32 %v1529, %v1749
        %v1778 = vadd.f32 %v1530, %v1754
        %v1779 = vadd.f32 %v1531, %v1757
        %v1780 = vadd.f32 %v1532, %v1762
        %v1781 = vadd.f32 %v1533, %v1765
        %v1782 = vadd.f32 %v1534, %v1770
        %v1783 = vadd.f32 %v1535, %v1773
        %s1784 = scalar_lea.vmem %s474, 160 [#allocation2]
        %v1785 = vld [vmem:[%s1784] sm:$0xf]
        %v1786 = vld [vmem:[%s1784 + $0x4] sm:$0xf]
        %v1787 = vld [vmem:[%s1784 + $0x8] sm:$0xf]
        %v1788 = vld [vmem:[%s1784 + $0xc] sm:$0xf]
        %v1789 = vld [vmem:[%s1784 + $0x10] sm:$0xf]
        %v1790 = vld [vmem:[%s1784 + $0x14] sm:$0xf]
        %v1791 = vld [vmem:[%s1784 + $0x18] sm:$0xf]
        %v1792 = vld [vmem:[%s1784 + $0x1c] sm:$0xf]
        %v1801 = vunpack.c.l.b16 %v1785
        %v1802 = vunpack.c.l.b16 %v1786
        %v1803 = vunpack.c.l.b16 %v1787
        %v1804 = vunpack.c.l.b16 %v1788
        %v1805 = vunpack.c.l.b16 %v1789
        %v1806 = vunpack.c.l.b16 %v1790
        %v1807 = vunpack.c.l.b16 %v1791
        %v1808 = vunpack.c.l.b16 %v1792
        %v1809 = vpack.c.b16 %v1802, %v1801
        %v1810 = vpack.c.b16 %v1804, %v1803
        %v1811 = vpack.c.b16 %v1806, %v1805
        %v1812 = vpack.c.b16 %v1808, %v1807
        %1817 = vmatprep.subr.bf16.mxu0 0
        %1818 = vmatpush1.bf16.msra.mxu0 %v578
        %1819 = vmatprep.subr.bf16.mxu0 0
        %1820 = vmatpush1.bf16.msra.mxu0 %v579
        %1821 = vmatprep.subr.bf16.mxu0 0
        %1822 = vmatpush1.bf16.msra.mxu0 %v580
        %1823 = vmatprep.subr.bf16.mxu0 0
        %1824 = vmatpush1.bf16.msra.mxu0 %v581
        %1825 = vmatprep.subr.bf16.mxu0 0
        %1826 = vmatpush1.bf16.msra.mxu0 %v582
        %1827 = vmatprep.subr.bf16.mxu0 0
        %1828 = vmatpush1.bf16.msra.mxu0 %v583
        %1829 = vmatprep.subr.bf16.mxu0 0
        %1830 = vmatpush1.bf16.msra.mxu0 %v584
        %1831 = vmatprep.subr.bf16.mxu0 0
        %1832 = vmatpush1.bf16.msra.mxu0 %v585
        %1833 = vmatprep.subr.bf16.mxu0 0
        %1834 = vmatpush1.bf16.msra.mxu0 0
        %1835 = vmatprep.subr.bf16.mxu0 0
        %1836 = vmatpush1.bf16.msra.mxu0 0
        %1837 = vmatprep.subr.bf16.mxu0 0
        %1838 = vmatpush1.bf16.msra.mxu0 0
        %1839 = vmatprep.subr.bf16.mxu0 0
        %1840 = vmatpush1.bf16.msra.mxu0 0
        %1841 = vmatprep.subr.bf16.mxu0 0
        %1842 = vmatpush1.bf16.msra.mxu0 0
        %1843 = vmatprep.subr.bf16.mxu0 0
        %1844 = vmatpush1.bf16.msra.mxu0 0
        %1845 = vmatprep.subr.bf16.mxu0 0
        %1846 = vmatpush1.bf16.msra.mxu0 0
        %1847 = vmatprep.subr.bf16.mxu0 0
        %1848 = vmatpush1.bf16.msra.mxu0 0
        %1849 = vmatprep.mubr.bf16.mxu0 0
        %1850 = vmatmul.mubr.bf16.gmra.mrb[0].mxu0 %v1809
        %v1851 = vpop.f32.mrb[0].mxu0
        %v1852 = vadd.f32 0.0, %v1851
        %v1853 = vpop.f32.mrb[0].mxu0
        %v1854 = vpop.f32.mrb[0].mxu0
        %v1855 = vadd.f32 0.0, %v1854
        %v1856 = vpop.f32.mrb[0].mxu0
        %1857 = vmatprep.mubr.bf16.mxu0 0
        %1858 = vmatmul.mubr.bf16.gmra.mrb[0].mxu0 %v1810
        %v1859 = vpop.f32.mrb[0].mxu0
        %v1860 = vadd.f32 0.0, %v1859
        %v1861 = vpop.f32.mrb[0].mxu0
        %v1862 = vpop.f32.mrb[0].mxu0
        %v1863 = vadd.f32 0.0, %v1862
        %v1864 = vpop.f32.mrb[0].mxu0
        %1865 = vmatprep.mubr.bf16.mxu0 0
        %1866 = vmatmul.mubr.bf16.gmra.mrb[0].mxu0 %v1811
        %v1867 = vpop.f32.mrb[0].mxu0
        %v1868 = vadd.f32 0.0, %v1867
        %v1869 = vpop.f32.mrb[0].mxu0
        %v1870 = vpop.f32.mrb[0].mxu0
        %v1871 = vadd.f32 0.0, %v1870
        %v1872 = vpop.f32.mrb[0].mxu0
        %1873 = vmatprep.mubr.bf16.mxu0 0
        %1874 = vmatmul.mubr.bf16.gmra.mrb[0].mxu0 %v1812
        %v1875 = vpop.f32.mrb[0].mxu0
        %v1876 = vadd.f32 0.0, %v1875
        %v1877 = vpop.f32.mrb[0].mxu0
        %v1878 = vpop.f32.mrb[0].mxu0
        %v1879 = vadd.f32 0.0, %v1878
        %v1880 = vpop.f32.mrb[0].mxu0
        %1881 = vdwg.mxu0
        %v1882 = vmax.f32 %v1852, 0.0
        %v1883 = vmax.f32 %v1855, 0.0
        %v1884 = vmax.f32 %v1860, 0.0
        %v1885 = vmax.f32 %v1863, 0.0
        %v1886 = vmax.f32 %v1868, 0.0
        %v1887 = vmax.f32 %v1871, 0.0
        %v1888 = vmax.f32 %v1876, 0.0
        %v1889 = vmax.f32 %v1879, 0.0
        %v1890 = vpack.c.bf16 %v1883, %v1882
        %v1891 = vpack.c.bf16 %v1885, %v1884
        %v1892 = vpack.c.bf16 %v1887, %v1886
        %v1893 = vpack.c.bf16 %v1889, %v1888
        %s1894 = scalar_lea.vmem %s2, 320
        %v1895 = vld [vmem:[%s1894] sm:$0xf]
        %v1896 = vld [vmem:[%s1894 + $0x4] sm:$0xf]
        %v1897 = vld [vmem:[%s1894 + $0x8] sm:$0xf]
        %v1898 = vld [vmem:[%s1894 + $0xc] sm:$0xf]
        %v1899 = vld [vmem:[%s1894 + $0x10] sm:$0xf]
        %v1900 = vld [vmem:[%s1894 + $0x14] sm:$0xf]
        %v1901 = vld [vmem:[%s1894 + $0x18] sm:$0xf]
        %v1902 = vld [vmem:[%s1894 + $0x1c] sm:$0xf]
        %v1903 = vld [vmem:[%s1894 + $0x20] sm:$0xf]
        %v1904 = vld [vmem:[%s1894 + $0x24] sm:$0xf]
        %v1905 = vld [vmem:[%s1894 + $0x28] sm:$0xf]
        %v1906 = vld [vmem:[%s1894 + $0x2c] sm:$0xf]
        %v1907 = vld [vmem:[%s1894 + $0x30] sm:$0xf]
        %v1908 = vld [vmem:[%s1894 + $0x34] sm:$0xf]
        %v1909 = vld [vmem:[%s1894 + $0x38] sm:$0xf]
        %v1910 = vld [vmem:[%s1894 + $0x3c] sm:$0xf]
        %v1927 = vunpack.c.l.b16 %v1895
        %v1928 = vunpack.c.l.b16 %v1896
        %v1929 = vunpack.c.l.b16 %v1897
        %v1930 = vunpack.c.l.b16 %v1898
        %v1931 = vunpack.c.l.b16 %v1899
        %v1932 = vunpack.c.l.b16 %v1900
        %v1933 = vunpack.c.l.b16 %v1901
        %v1934 = vunpack.c.l.b16 %v1902
        %v1935 = vunpack.c.l.b16 %v1903
        %v1936 = vunpack.c.l.b16 %v1904
        %v1937 = vunpack.c.l.b16 %v1905
        %v1938 = vunpack.c.l.b16 %v1906
        %v1939 = vunpack.c.l.b16 %v1907
        %v1940 = vunpack.c.l.b16 %v1908
        %v1941 = vunpack.c.l.b16 %v1909
        %v1942 = vunpack.c.l.b16 %v1910
        %v1943 = vpack.c.b16 %v1928, %v1927
        %v1944 = vpack.c.b16 %v1930, %v1929
        %v1945 = vpack.c.b16 %v1932, %v1931
        %v1946 = vpack.c.b16 %v1934, %v1933
        %v1947 = vpack.c.b16 %v1936, %v1935
        %v1948 = vpack.c.b16 %v1938, %v1937
        %v1949 = vpack.c.b16 %v1940, %v1939
        %v1950 = vpack.c.b16 %v1942, %v1941
        %1959 = vmatprep.subr.bf16.mxu0 0
        %1960 = vmatpush1.bf16.msra.mxu0 %v1943
        %1961 = vmatprep.subr.bf16.mxu0 0
        %1962 = vmatpush1.bf16.msra.mxu0 %v1944
        %1963 = vmatprep.subr.bf16.mxu0 0
        %1964 = vmatpush1.bf16.msra.mxu0 %v1945
        %1965 = vmatprep.subr.bf16.mxu0 0
        %1966 = vmatpush1.bf16.msra.mxu0 %v1946
        %1967 = vmatprep.subr.bf16.mxu0 0
        %1968 = vmatpush1.bf16.msra.mxu0 %v1947
        %1969 = vmatprep.subr.bf16.mxu0 0
        %1970 = vmatpush1.bf16.msra.mxu0 %v1948
        %1971 = vmatprep.subr.bf16.mxu0 0
        %1972 = vmatpush1.bf16.msra.mxu0 %v1949
        %1973 = vmatprep.subr.bf16.mxu0 0
        %1974 = vmatpush1.bf16.msra.mxu0 %v1950
        %1975 = vmatprep.subr.bf16.mxu0 0
        %1976 = vmatpush1.bf16.msra.mxu0 0
        %1977 = vmatprep.subr.bf16.mxu0 0
        %1978 = vmatpush1.bf16.msra.mxu0 0
        %1979 = vmatprep.subr.bf16.mxu0 0
        %1980 = vmatpush1.bf16.msra.mxu0 0
        %1981 = vmatprep.subr.bf16.mxu0 0
        %1982 = vmatpush1.bf16.msra.mxu0 0
        %1983 = vmatprep.subr.bf16.mxu0 0
        %1984 = vmatpush1.bf16.msra.mxu0 0
        %1985 = vmatprep.subr.bf16.mxu0 0
        %1986 = vmatpush1.bf16.msra.mxu0 0
        %1987 = vmatprep.subr.bf16.mxu0 0
        %1988 = vmatpush1.bf16.msra.mxu0 0
        %1989 = vmatprep.subr.bf16.mxu0 0
        %1990 = vmatpush1.bf16.msra.mxu0 0
        %1991 = vmatprep.mubr.bf16.mxu0 0
        %1992 = vmatmul.mubr.bf16.gmra.mrb[0].mxu0 %v1890
        %v1993 = vpop.f32.mrb[0].mxu0
        %v1994 = vadd.f32 0.0, %v1993
        %v1995 = vpop.f32.mrb[0].mxu0
        %v1996 = vpop.f32.mrb[0].mxu0
        %v1997 = vadd.f32 0.0, %v1996
        %v1998 = vpop.f32.mrb[0].mxu0
        %1999 = vmatprep.mubr.bf16.mxu0 0
        %2000 = vmatmul.mubr.bf16.gmra.mrb[0].mxu0 %v1891
        %v2001 = vpop.f32.mrb[0].mxu0
        %v2002 = vadd.f32 0.0, %v2001
        %v2003 = vpop.f32.mrb[0].mxu0
        %v2004 = vpop.f32.mrb[0].mxu0
        %v2005 = vadd.f32 0.0, %v2004
        %v2006 = vpop.f32.mrb[0].mxu0
        %2007 = vmatprep.mubr.bf16.mxu0 0
        %2008 = vmatmul.mubr.bf16.gmra.mrb[0].mxu0 %v1892
        %v2009 = vpop.f32.mrb[0].mxu0
        %v2010 = vadd.f32 0.0, %v2009
        %v2011 = vpop.f32.mrb[0].mxu0
        %v2012 = vpop.f32.mrb[0].mxu0
        %v2013 = vadd.f32 0.0, %v2012
        %v2014 = vpop.f32.mrb[0].mxu0
        %2015 = vmatprep.mubr.bf16.mxu0 0
        %2016 = vmatmul.mubr.bf16.gmra.mrb[0].mxu0 %v1893
        %v2017 = vpop.f32.mrb[0].mxu0
        %v2018 = vadd.f32 0.0, %v2017
        %v2019 = vpop.f32.mrb[0].mxu0
        %v2020 = vpop.f32.mrb[0].mxu0
        %v2021 = vadd.f32 0.0, %v2020
        %v2022 = vpop.f32.mrb[0].mxu0
        %2023 = vdwg.mxu0
        %v2024 = vadd.f32 %v1776, %v1994
        %v2025 = vadd.f32 %v1777, %v1997
        %v2026 = vadd.f32 %v1778, %v2002
        %v2027 = vadd.f32 %v1779, %v2005
        %v2028 = vadd.f32 %v1780, %v2010
        %v2029 = vadd.f32 %v1781, %v2013
        %v2030 = vadd.f32 %v1782, %v2018
        %v2031 = vadd.f32 %v1783, %v2021
        %s2032 = scalar_lea.vmem %s474, 192 [#allocation2]
        %v2033 = vld [vmem:[%s2032] sm:$0xf]
        %v2034 = vld [vmem:[%s2032 + $0x4] sm:$0xf]
        %v2035 = vld [vmem:[%s2032 + $0x8] sm:$0xf]
        %v2036 = vld [vmem:[%s2032 + $0xc] sm:$0xf]
        %v2037 = vld [vmem:[%s2032 + $0x10] sm:$0xf]
        %v2038 = vld [vmem:[%s2032 + $0x14] sm:$0xf]
        %v2039 = vld [vmem:[%s2032 + $0x18] sm:$0xf]
        %v2040 = vld [vmem:[%s2032 + $0x1c] sm:$0xf]
        %v2049 = vunpack.c.l.b16 %v2033
        %v2050 = vunpack.c.l.b16 %v2034
        %v2051 = vunpack.c.l.b16 %v2035
        %v2052 = vunpack.c.l.b16 %v2036
        %v2053 = vunpack.c.l.b16 %v2037
        %v2054 = vunpack.c.l.b16 %v2038
        %v2055 = vunpack.c.l.b16 %v2039
        %v2056 = vunpack.c.l.b16 %v2040
        %v2057 = vpack.c.b16 %v2050, %v2049
        %v2058 = vpack.c.b16 %v2052, %v2051
        %v2059 = vpack.c.b16 %v2054, %v2053
        %v2060 = vpack.c.b16 %v2056, %v2055
        %2065 = vmatprep.subr.bf16.mxu0 0
        %2066 = vmatpush1.bf16.msra.mxu0 %v578
        %2067 = vmatprep.subr.bf16.mxu0 0
        %2068 = vmatpush1.bf16.msra.mxu0 %v579
        %2069 = vmatprep.subr.bf16.mxu0 0
        %2070 = vmatpush1.bf16.msra.mxu0 %v580
        %2071 = vmatprep.subr.bf16.mxu0 0
        %2072 = vmatpush1.bf16.msra.mxu0 %v581
        %2073 = vmatprep.subr.bf16.mxu0 0
        %2074 = vmatpush1.bf16.msra.mxu0 %v582
        %2075 = vmatprep.subr.bf16.mxu0 0
        %2076 = vmatpush1.bf16.msra.mxu0 %v583
        %2077 = vmatprep.subr.bf16.mxu0 0
        %2078 = vmatpush1.bf16.msra.mxu0 %v584
        %2079 = vmatprep.subr.bf16.mxu0 0
        %2080 = vmatpush1.bf16.msra.mxu0 %v585
        %2081 = vmatprep.subr.bf16.mxu0 0
        %2082 = vmatpush1.bf16.msra.mxu0 0
        %2083 = vmatprep.subr.bf16.mxu0 0
        %2084 = vmatpush1.bf16.msra.mxu0 0
        %2085 = vmatprep.subr.bf16.mxu0 0
        %2086 = vmatpush1.bf16.msra.mxu0 0
        %2087 = vmatprep.subr.bf16.mxu0 0
        %2088 = vmatpush1.bf16.msra.mxu0 0
        %2089 = vmatprep.subr.bf16.mxu0 0
        %2090 = vmatpush1.bf16.msra.mxu0 0
        %2091 = vmatprep.subr.bf16.mxu0 0
        %2092 = vmatpush1.bf16.msra.mxu0 0
        %2093 = vmatprep.subr.bf16.mxu0 0
        %2094 = vmatpush1.bf16.msra.mxu0 0
        %2095 = vmatprep.subr.bf16.mxu0 0
        %2096 = vmatpush1.bf16.msra.mxu0 0
        %2097 = vmatprep.mubr.bf16.mxu0 0
        %2098 = vmatmul.mubr.bf16.gmra.mrb[0].mxu0 %v2057
        %v2099 = vpop.f32.mrb[0].mxu0
        %v2100 = vadd.f32 0.0, %v2099
        %v2101 = vpop.f32.mrb[0].mxu0
        %v2102 = vpop.f32.mrb[0].mxu0
        %v2103 = vadd.f32 0.0, %v2102
        %v2104 = vpop.f32.mrb[0].mxu0
        %2105 = vmatprep.mubr.bf16.mxu0 0
        %2106 = vmatmul.mubr.bf16.gmra.mrb[0].mxu0 %v2058
        %v2107 = vpop.f32.mrb[0].mxu0
        %v2108 = vadd.f32 0.0, %v2107
        %v2109 = vpop.f32.mrb[0].mxu0
        %v2110 = vpop.f32.mrb[0].mxu0
        %v2111 = vadd.f32 0.0, %v2110
        %v2112 = vpop.f32.mrb[0].mxu0
        %2113 = vmatprep.mubr.bf16.mxu0 0
        %2114 = vmatmul.mubr.bf16.gmra.mrb[0].mxu0 %v2059
        %v2115 = vpop.f32.mrb[0].mxu0
        %v2116 = vadd.f32 0.0, %v2115
        %v2117 = vpop.f32.mrb[0].mxu0
        %v2118 = vpop.f32.mrb[0].mxu0
        %v2119 = vadd.f32 0.0, %v2118
        %v2120 = vpop.f32.mrb[0].mxu0
        %2121 = vmatprep.mubr.bf16.mxu0 0
        %2122 = vmatmul.mubr.bf16.gmra.mrb[0].mxu0 %v2060
        %v2123 = vpop.f32.mrb[0].mxu0
        %v2124 = vadd.f32 0.0, %v2123
        %v2125 = vpop.f32.mrb[0].mxu0
        %v2126 = vpop.f32.mrb[0].mxu0
        %v2127 = vadd.f32 0.0, %v2126
        %v2128 = vpop.f32.mrb[0].mxu0
        %2129 = vdwg.mxu0
        %v2130 = vmax.f32 %v2100, 0.0
        %v2131 = vmax.f32 %v2103, 0.0
        %v2132 = vmax.f32 %v2108, 0.0
        %v2133 = vmax.f32 %v2111, 0.0
        %v2134 = vmax.f32 %v2116, 0.0
        %v2135 = vmax.f32 %v2119, 0.0
        %v2136 = vmax.f32 %v2124, 0.0
        %v2137 = vmax.f32 %v2127, 0.0
        %v2138 = vpack.c.bf16 %v2131, %v2130
        %v2139 = vpack.c.bf16 %v2133, %v2132
        %v2140 = vpack.c.bf16 %v2135, %v2134
        %v2141 = vpack.c.bf16 %v2137, %v2136
        %s2142 = scalar_lea.vmem %s2, 384
        %v2143 = vld [vmem:[%s2142] sm:$0xf]
        %v2144 = vld [vmem:[%s2142 + $0x4] sm:$0xf]
        %v2145 = vld [vmem:[%s2142 + $0x8] sm:$0xf]
        %v2146 = vld [vmem:[%s2142 + $0xc] sm:$0xf]
        %v2147 = vld [vmem:[%s2142 + $0x10] sm:$0xf]
        %v2148 = vld [vmem:[%s2142 + $0x14] sm:$0xf]
        %v2149 = vld [vmem:[%s2142 + $0x18] sm:$0xf]
        %v2150 = vld [vmem:[%s2142 + $0x1c] sm:$0xf]
        %v2151 = vld [vmem:[%s2142 + $0x20] sm:$0xf]
        %v2152 = vld [vmem:[%s2142 + $0x24] sm:$0xf]
        %v2153 = vld [vmem:[%s2142 + $0x28] sm:$0xf]
        %v2154 = vld [vmem:[%s2142 + $0x2c] sm:$0xf]
        %v2155 = vld [vmem:[%s2142 + $0x30] sm:$0xf]
        %v2156 = vld [vmem:[%s2142 + $0x34] sm:$0xf]
        %v2157 = vld [vmem:[%s2142 + $0x38] sm:$0xf]
        %v2158 = vld [vmem:[%s2142 + $0x3c] sm:$0xf]
        %v2175 = vunpack.c.l.b16 %v2143
        %v2176 = vunpack.c.l.b16 %v2144
        %v2177 = vunpack.c.l.b16 %v2145
        %v2178 = vunpack.c.l.b16 %v2146
        %v2179 = vunpack.c.l.b16 %v2147
        %v2180 = vunpack.c.l.b16 %v2148
        %v2181 = vunpack.c.l.b16 %v2149
        %v2182 = vunpack.c.l.b16 %v2150
        %v2183 = vunpack.c.l.b16 %v2151
        %v2184 = vunpack.c.l.b16 %v2152
        %v2185 = vunpack.c.l.b16 %v2153
        %v2186 = vunpack.c.l.b16 %v2154
        %v2187 = vunpack.c.l.b16 %v2155
        %v2188 = vunpack.c.l.b16 %v2156
        %v2189 = vunpack.c.l.b16 %v2157
        %v2190 = vunpack.c.l.b16 %v2158
        %v2191 = vpack.c.b16 %v2176, %v2175
        %v2192 = vpack.c.b16 %v2178, %v2177
        %v2193 = vpack.c.b16 %v2180, %v2179
        %v2194 = vpack.c.b16 %v2182, %v2181
        %v2195 = vpack.c.b16 %v2184, %v2183
        %v2196 = vpack.c.b16 %v2186, %v2185
        %v2197 = vpack.c.b16 %v2188, %v2187
        %v2198 = vpack.c.b16 %v2190, %v2189
        %2207 = vmatprep.subr.bf16.mxu0 0
        %2208 = vmatpush1.bf16.msra.mxu0 %v2191
        %2209 = vmatprep.subr.bf16.mxu0 0
        %2210 = vmatpush1.bf16.msra.mxu0 %v2192
        %2211 = vmatprep.subr.bf16.mxu0 0
        %2212 = vmatpush1.bf16.msra.mxu0 %v2193
        %2213 = vmatprep.subr.bf16.mxu0 0
        %2214 = vmatpush1.bf16.msra.mxu0 %v2194
        %2215 = vmatprep.subr.bf16.mxu0 0
        %2216 = vmatpush1.bf16.msra.mxu0 %v2195
        %2217 = vmatprep.subr.bf16.mxu0 0
        %2218 = vmatpush1.bf16.msra.mxu0 %v2196
        %2219 = vmatprep.subr.bf16.mxu0 0
        %2220 = vmatpush1.bf16.msra.mxu0 %v2197
        %2221 = vmatprep.subr.bf16.mxu0 0
        %2222 = vmatpush1.bf16.msra.mxu0 %v2198
        %2223 = vmatprep.subr.bf16.mxu0 0
        %2224 = vmatpush1.bf16.msra.mxu0 0
        %2225 = vmatprep.subr.bf16.mxu0 0
        %2226 = vmatpush1.bf16.msra.mxu0 0
        %2227 = vmatprep.subr.bf16.mxu0 0
        %2228 = vmatpush1.bf16.msra.mxu0 0
        %2229 = vmatprep.subr.bf16.mxu0 0
        %2230 = vmatpush1.bf16.msra.mxu0 0
        %2231 = vmatprep.subr.bf16.mxu0 0
        %2232 = vmatpush1.bf16.msra.mxu0 0
        %2233 = vmatprep.subr.bf16.mxu0 0
        %2234 = vmatpush1.bf16.msra.mxu0 0
        %2235 = vmatprep.subr.bf16.mxu0 0
        %2236 = vmatpush1.bf16.msra.mxu0 0
        %2237 = vmatprep.subr.bf16.mxu0 0
        %2238 = vmatpush1.bf16.msra.mxu0 0
        %2239 = vmatprep.mubr.bf16.mxu0 0
        %2240 = vmatmul.mubr.bf16.gmra.mrb[0].mxu0 %v2138
        %v2241 = vpop.f32.mrb[0].mxu0
        %v2242 = vadd.f32 0.0, %v2241
        %v2243 = vpop.f32.mrb[0].mxu0
        %v2244 = vpop.f32.mrb[0].mxu0
        %v2245 = vadd.f32 0.0, %v2244
        %v2246 = vpop.f32.mrb[0].mxu0
        %2247 = vmatprep.mubr.bf16.mxu0 0
        %2248 = vmatmul.mubr.bf16.gmra.mrb[0].mxu0 %v2139
        %v2249 = vpop.f32.mrb[0].mxu0
        %v2250 = vadd.f32 0.0, %v2249
        %v2251 = vpop.f32.mrb[0].mxu0
        %v2252 = vpop.f32.mrb[0].mxu0
        %v2253 = vadd.f32 0.0, %v2252
        %v2254 = vpop.f32.mrb[0].mxu0
        %2255 = vmatprep.mubr.bf16.mxu0 0
        %2256 = vmatmul.mubr.bf16.gmra.mrb[0].mxu0 %v2140
        %v2257 = vpop.f32.mrb[0].mxu0
        %v2258 = vadd.f32 0.0, %v2257
        %v2259 = vpop.f32.mrb[0].mxu0
        %v2260 = vpop.f32.mrb[0].mxu0
        %v2261 = vadd.f32 0.0, %v2260
        %v2262 = vpop.f32.mrb[0].mxu0
        %2263 = vmatprep.mubr.bf16.mxu0 0
        %2264 = vmatmul.mubr.bf16.gmra.mrb[0].mxu0 %v2141
        %v2265 = vpop.f32.mrb[0].mxu0
        %v2266 = vadd.f32 0.0, %v2265
        %v2267 = vpop.f32.mrb[0].mxu0
        %v2268 = vpop.f32.mrb[0].mxu0
        %v2269 = vadd.f32 0.0, %v2268
        %v2270 = vpop.f32.mrb[0].mxu0
        %2271 = vdwg.mxu0
        %v2272 = vadd.f32 %v2024, %v2242
        %v2273 = vadd.f32 %v2025, %v2245
        %v2274 = vadd.f32 %v2026, %v2250
        %v2275 = vadd.f32 %v2027, %v2253
        %v2276 = vadd.f32 %v2028, %v2258
        %v2277 = vadd.f32 %v2029, %v2261
        %v2278 = vadd.f32 %v2030, %v2266
        %v2279 = vadd.f32 %v2031, %v2269
        %s2280 = scalar_lea.vmem %s474, 224 [#allocation2]
        %v2281 = vld [vmem:[%s2280] sm:$0xf]
        %v2282 = vld [vmem:[%s2280 + $0x4] sm:$0xf]
        %v2283 = vld [vmem:[%s2280 + $0x8] sm:$0xf]
        %v2284 = vld [vmem:[%s2280 + $0xc] sm:$0xf]
        %v2285 = vld [vmem:[%s2280 + $0x10] sm:$0xf]
        %v2286 = vld [vmem:[%s2280 + $0x14] sm:$0xf]
        %v2287 = vld [vmem:[%s2280 + $0x18] sm:$0xf]
        %v2288 = vld [vmem:[%s2280 + $0x1c] sm:$0xf]
        %v2297 = vunpack.c.l.b16 %v2281
        %v2298 = vunpack.c.l.b16 %v2282
        %v2299 = vunpack.c.l.b16 %v2283
        %v2300 = vunpack.c.l.b16 %v2284
        %v2301 = vunpack.c.l.b16 %v2285
        %v2302 = vunpack.c.l.b16 %v2286
        %v2303 = vunpack.c.l.b16 %v2287
        %v2304 = vunpack.c.l.b16 %v2288
        %v2305 = vpack.c.b16 %v2298, %v2297
        %v2306 = vpack.c.b16 %v2300, %v2299
        %v2307 = vpack.c.b16 %v2302, %v2301
        %v2308 = vpack.c.b16 %v2304, %v2303
        %2313 = vmatprep.subr.bf16.mxu0 0
        %2314 = vmatpush1.bf16.msra.mxu0 %v578
        %2315 = vmatprep.subr.bf16.mxu0 0
        %2316 = vmatpush1.bf16.msra.mxu0 %v579
        %2317 = vmatprep.subr.bf16.mxu0 0
        %2318 = vmatpush1.bf16.msra.mxu0 %v580
        %2319 = vmatprep.subr.bf16.mxu0 0
        %2320 = vmatpush1.bf16.msra.mxu0 %v581
        %2321 = vmatprep.subr.bf16.mxu0 0
        %2322 = vmatpush1.bf16.msra.mxu0 %v582
        %2323 = vmatprep.subr.bf16.mxu0 0
        %2324 = vmatpush1.bf16.msra.mxu0 %v583
        %2325 = vmatprep.subr.bf16.mxu0 0
        %2326 = vmatpush1.bf16.msra.mxu0 %v584
        %2327 = vmatprep.subr.bf16.mxu0 0
        %2328 = vmatpush1.bf16.msra.mxu0 %v585
        %2329 = vmatprep.subr.bf16.mxu0 0
        %2330 = vmatpush1.bf16.msra.mxu0 0
        %2331 = vmatprep.subr.bf16.mxu0 0
        %2332 = vmatpush1.bf16.msra.mxu0 0
        %2333 = vmatprep.subr.bf16.mxu0 0
        %2334 = vmatpush1.bf16.msra.mxu0 0
        %2335 = vmatprep.subr.bf16.mxu0 0
        %2336 = vmatpush1.bf16.msra.mxu0 0
        %2337 = vmatprep.subr.bf16.mxu0 0
        %2338 = vmatpush1.bf16.msra.mxu0 0
        %2339 = vmatprep.subr.bf16.mxu0 0
        %2340 = vmatpush1.bf16.msra.mxu0 0
        %2341 = vmatprep.subr.bf16.mxu0 0
        %2342 = vmatpush1.bf16.msra.mxu0 0
        %2343 = vmatprep.subr.bf16.mxu0 0
        %2344 = vmatpush1.bf16.msra.mxu0 0
        %2345 = vmatprep.mubr.bf16.mxu0 0
        %2346 = vmatmul.mubr.bf16.gmra.mrb[0].mxu0 %v2305
        %v2347 = vpop.f32.mrb[0].mxu0
        %v2348 = vadd.f32 0.0, %v2347
        %v2349 = vpop.f32.mrb[0].mxu0
        %v2350 = vpop.f32.mrb[0].mxu0
        %v2351 = vadd.f32 0.0, %v2350
        %v2352 = vpop.f32.mrb[0].mxu0
        %2353 = vmatprep.mubr.bf16.mxu0 0
        %2354 = vmatmul.mubr.bf16.gmra.mrb[0].mxu0 %v2306
        %v2355 = vpop.f32.mrb[0].mxu0
        %v2356 = vadd.f32 0.0, %v2355
        %v2357 = vpop.f32.mrb[0].mxu0
        %v2358 = vpop.f32.mrb[0].mxu0
        %v2359 = vadd.f32 0.0, %v2358
        %v2360 = vpop.f32.mrb[0].mxu0
        %2361 = vmatprep.mubr.bf16.mxu0 0
        %2362 = vmatmul.mubr.bf16.gmra.mrb[0].mxu0 %v2307
        %v2363 = vpop.f32.mrb[0].mxu0
        %v2364 = vadd.f32 0.0, %v2363
        %v2365 = vpop.f32.mrb[0].mxu0
        %v2366 = vpop.f32.mrb[0].mxu0
        %v2367 = vadd.f32 0.0, %v2366
        %v2368 = vpop.f32.mrb[0].mxu0
        %2369 = vmatprep.mubr.bf16.mxu0 0
        %2370 = vmatmul.mubr.bf16.gmra.mrb[0].mxu0 %v2308
        %v2371 = vpop.f32.mrb[0].mxu0
        %v2372 = vadd.f32 0.0, %v2371
        %v2373 = vpop.f32.mrb[0].mxu0
        %v2374 = vpop.f32.mrb[0].mxu0
        %v2375 = vadd.f32 0.0, %v2374
        %v2376 = vpop.f32.mrb[0].mxu0
        %2377 = vdwg.mxu0
        %v2378 = vmax.f32 %v2348, 0.0
        %v2379 = vmax.f32 %v2351, 0.0
        %v2380 = vmax.f32 %v2356, 0.0
        %v2381 = vmax.f32 %v2359, 0.0
        %v2382 = vmax.f32 %v2364, 0.0
        %v2383 = vmax.f32 %v2367, 0.0
        %v2384 = vmax.f32 %v2372, 0.0
        %v2385 = vmax.f32 %v2375, 0.0
        %v2386 = vpack.c.bf16 %v2379, %v2378
        %v2387 = vpack.c.bf16 %v2381, %v2380
        %v2388 = vpack.c.bf16 %v2383, %v2382
        %v2389 = vpack.c.bf16 %v2385, %v2384
        %s2390 = scalar_lea.vmem %s2, 448
        %v2391 = vld [vmem:[%s2390] sm:$0xf]
        %v2392 = vld [vmem:[%s2390 + $0x4] sm:$0xf]
        %v2393 = vld [vmem:[%s2390 + $0x8] sm:$0xf]
        %v2394 = vld [vmem:[%s2390 + $0xc] sm:$0xf]
        %v2395 = vld [vmem:[%s2390 + $0x10] sm:$0xf]
        %v2396 = vld [vmem:[%s2390 + $0x14] sm:$0xf]
        %v2397 = vld [vmem:[%s2390 + $0x18] sm:$0xf]
        %v2398 = vld [vmem:[%s2390 + $0x1c] sm:$0xf]
        %v2399 = vld [vmem:[%s2390 + $0x20] sm:$0xf]
        %v2400 = vld [vmem:[%s2390 + $0x24] sm:$0xf]
        %v2401 = vld [vmem:[%s2390 + $0x28] sm:$0xf]
        %v2402 = vld [vmem:[%s2390 + $0x2c] sm:$0xf]
        %v2403 = vld [vmem:[%s2390 + $0x30] sm:$0xf]
        %v2404 = vld [vmem:[%s2390 + $0x34] sm:$0xf]
        %v2405 = vld [vmem:[%s2390 + $0x38] sm:$0xf]
        %v2406 = vld [vmem:[%s2390 + $0x3c] sm:$0xf]
        %v2423 = vunpack.c.l.b16 %v2391
        %v2424 = vunpack.c.l.b16 %v2392
        %v2425 = vunpack.c.l.b16 %v2393
        %v2426 = vunpack.c.l.b16 %v2394
        %v2427 = vunpack.c.l.b16 %v2395
        %v2428 = vunpack.c.l.b16 %v2396
        %v2429 = vunpack.c.l.b16 %v2397
        %v2430 = vunpack.c.l.b16 %v2398
        %v2431 = vunpack.c.l.b16 %v2399
        %v2432 = vunpack.c.l.b16 %v2400
        %v2433 = vunpack.c.l.b16 %v2401
        %v2434 = vunpack.c.l.b16 %v2402
        %v2435 = vunpack.c.l.b16 %v2403
        %v2436 = vunpack.c.l.b16 %v2404
        %v2437 = vunpack.c.l.b16 %v2405
        %v2438 = vunpack.c.l.b16 %v2406
        %v2439 = vpack.c.b16 %v2424, %v2423
        %v2440 = vpack.c.b16 %v2426, %v2425
        %v2441 = vpack.c.b16 %v2428, %v2427
        %v2442 = vpack.c.b16 %v2430, %v2429
        %v2443 = vpack.c.b16 %v2432, %v2431
        %v2444 = vpack.c.b16 %v2434, %v2433
        %v2445 = vpack.c.b16 %v2436, %v2435
        %v2446 = vpack.c.b16 %v2438, %v2437
        %2455 = vmatprep.subr.bf16.mxu0 0
        %2456 = vmatpush1.bf16.msra.mxu0 %v2439
        %2457 = vmatprep.subr.bf16.mxu0 0
        %2458 = vmatpush1.bf16.msra.mxu0 %v2440
        %2459 = vmatprep.subr.bf16.mxu0 0
        %2460 = vmatpush1.bf16.msra.mxu0 %v2441
        %2461 = vmatprep.subr.bf16.mxu0 0
        %2462 = vmatpush1.bf16.msra.mxu0 %v2442
        %2463 = vmatprep.subr.bf16.mxu0 0
        %2464 = vmatpush1.bf16.msra.mxu0 %v2443
        %2465 = vmatprep.subr.bf16.mxu0 0
        %2466 = vmatpush1.bf16.msra.mxu0 %v2444
        %2467 = vmatprep.subr.bf16.mxu0 0
        %2468 = vmatpush1.bf16.msra.mxu0 %v2445
        %2469 = vmatprep.subr.bf16.mxu0 0
        %2470 = vmatpush1.bf16.msra.mxu0 %v2446
        %2471 = vmatprep.subr.bf16.mxu0 0
        %2472 = vmatpush1.bf16.msra.mxu0 0
        %2473 = vmatprep.subr.bf16.mxu0 0
        %2474 = vmatpush1.bf16.msra.mxu0 0
        %2475 = vmatprep.subr.bf16.mxu0 0
        %2476 = vmatpush1.bf16.msra.mxu0 0
        %2477 = vmatprep.subr.bf16.mxu0 0
        %2478 = vmatpush1.bf16.msra.mxu0 0
        %2479 = vmatprep.subr.bf16.mxu0 0
        %2480 = vmatpush1.bf16.msra.mxu0 0
        %2481 = vmatprep.subr.bf16.mxu0 0
        %2482 = vmatpush1.bf16.msra.mxu0 0
        %2483 = vmatprep.subr.bf16.mxu0 0
        %2484 = vmatpush1.bf16.msra.mxu0 0
        %2485 = vmatprep.subr.bf16.mxu0 0
        %2486 = vmatpush1.bf16.msra.mxu0 0
        %2487 = vmatprep.mubr.bf16.mxu0 0
        %2488 = vmatmul.mubr.bf16.gmra.mrb[0].mxu0 %v2386
        %v2489 = vpop.f32.mrb[0].mxu0
        %v2490 = vadd.f32 0.0, %v2489
        %v2491 = vpop.f32.mrb[0].mxu0
        %v2492 = vpop.f32.mrb[0].mxu0
        %v2493 = vadd.f32 0.0, %v2492
        %v2494 = vpop.f32.mrb[0].mxu0
        %2495 = vmatprep.mubr.bf16.mxu0 0
        %2496 = vmatmul.mubr.bf16.gmra.mrb[0].mxu0 %v2387
        %v2497 = vpop.f32.mrb[0].mxu0
        %v2498 = vadd.f32 0.0, %v2497
        %v2499 = vpop.f32.mrb[0].mxu0
        %v2500 = vpop.f32.mrb[0].mxu0
        %v2501 = vadd.f32 0.0, %v2500
        %v2502 = vpop.f32.mrb[0].mxu0
        %2503 = vmatprep.mubr.bf16.mxu0 0
        %2504 = vmatmul.mubr.bf16.gmra.mrb[0].mxu0 %v2388
        %v2505 = vpop.f32.mrb[0].mxu0
        %v2506 = vadd.f32 0.0, %v2505
        %v2507 = vpop.f32.mrb[0].mxu0
        %v2508 = vpop.f32.mrb[0].mxu0
        %v2509 = vadd.f32 0.0, %v2508
        %v2510 = vpop.f32.mrb[0].mxu0
        %2511 = vmatprep.mubr.bf16.mxu0 0
        %2512 = vmatmul.mubr.bf16.gmra.mrb[0].mxu0 %v2389
        %v2513 = vpop.f32.mrb[0].mxu0
        %v2514 = vadd.f32 0.0, %v2513
        %v2515 = vpop.f32.mrb[0].mxu0
        %v2516 = vpop.f32.mrb[0].mxu0
        %v2517 = vadd.f32 0.0, %v2516
        %v2518 = vpop.f32.mrb[0].mxu0
        %2519 = vdwg.mxu0
        %v2520 = vadd.f32 %v2272, %v2490
        %v2521 = vadd.f32 %v2273, %v2493
        %v2522 = vadd.f32 %v2274, %v2498
        %v2523 = vadd.f32 %v2275, %v2501
        %v2524 = vadd.f32 %v2276, %v2506
        %v2525 = vadd.f32 %v2277, %v2509
        %v2526 = vadd.f32 %v2278, %v2514
        %v2527 = vadd.f32 %v2279, %v2517
        %s2528 = scalar_lea.vmem %s474, 256 [#allocation2]
        %v2529 = vld [vmem:[%s2528] sm:$0xf]
        %v2530 = vld [vmem:[%s2528 + $0x4] sm:$0xf]
        %v2531 = vld [vmem:[%s2528 + $0x8] sm:$0xf]
        %v2532 = vld [vmem:[%s2528 + $0xc] sm:$0xf]
        %v2533 = vld [vmem:[%s2528 + $0x10] sm:$0xf]
        %v2534 = vld [vmem:[%s2528 + $0x14] sm:$0xf]
        %v2535 = vld [vmem:[%s2528 + $0x18] sm:$0xf]
        %v2536 = vld [vmem:[%s2528 + $0x1c] sm:$0xf]
        %v2545 = vunpack.c.l.b16 %v2529
        %v2546 = vunpack.c.l.b16 %v2530
        %v2547 = vunpack.c.l.b16 %v2531
        %v2548 = vunpack.c.l.b16 %v2532
        %v2549 = vunpack.c.l.b16 %v2533
        %v2550 = vunpack.c.l.b16 %v2534
        %v2551 = vunpack.c.l.b16 %v2535
        %v2552 = vunpack.c.l.b16 %v2536
        %v2553 = vpack.c.b16 %v2546, %v2545
        %v2554 = vpack.c.b16 %v2548, %v2547
        %v2555 = vpack.c.b16 %v2550, %v2549
        %v2556 = vpack.c.b16 %v2552, %v2551
        %2561 = vmatprep.subr.bf16.mxu0 0
        %2562 = vmatpush1.bf16.msra.mxu0 %v578
        %2563 = vmatprep.subr.bf16.mxu0 0
        %2564 = vmatpush1.bf16.msra.mxu0 %v579
        %2565 = vmatprep.subr.bf16.mxu0 0
        %2566 = vmatpush1.bf16.msra.mxu0 %v580
        %2567 = vmatprep.subr.bf16.mxu0 0
        %2568 = vmatpush1.bf16.msra.mxu0 %v581
        %2569 = vmatprep.subr.bf16.mxu0 0
        %2570 = vmatpush1.bf16.msra.mxu0 %v582
        %2571 = vmatprep.subr.bf16.mxu0 0
        %2572 = vmatpush1.bf16.msra.mxu0 %v583
        %2573 = vmatprep.subr.bf16.mxu0 0
        %2574 = vmatpush1.bf16.msra.mxu0 %v584
        %2575 = vmatprep.subr.bf16.mxu0 0
        %2576 = vmatpush1.bf16.msra.mxu0 %v585
        %2577 = vmatprep.subr.bf16.mxu0 0
        %2578 = vmatpush1.bf16.msra.mxu0 0
        %2579 = vmatprep.subr.bf16.mxu0 0
        %2580 = vmatpush1.bf16.msra.mxu0 0
        %2581 = vmatprep.subr.bf16.mxu0 0
        %2582 = vmatpush1.bf16.msra.mxu0 0
        %2583 = vmatprep.subr.bf16.mxu0 0
        %2584 = vmatpush1.bf16.msra.mxu0 0
        %2585 = vmatprep.subr.bf16.mxu0 0
        %2586 = vmatpush1.bf16.msra.mxu0 0
        %2587 = vmatprep.subr.bf16.mxu0 0
        %2588 = vmatpush1.bf16.msra.mxu0 0
        %2589 = vmatprep.subr.bf16.mxu0 0
        %2590 = vmatpush1.bf16.msra.mxu0 0
        %2591 = vmatprep.subr.bf16.mxu0 0
        %2592 = vmatpush1.bf16.msra.mxu0 0
        %2593 = vmatprep.mubr.bf16.mxu0 0
        %2594 = vmatmul.mubr.bf16.gmra.mrb[0].mxu0 %v2553
        %v2595 = vpop.f32.mrb[0].mxu0
        %v2596 = vadd.f32 0.0, %v2595
        %v2597 = vpop.f32.mrb[0].mxu0
        %v2598 = vpop.f32.mrb[0].mxu0
        %v2599 = vadd.f32 0.0, %v2598
        %v2600 = vpop.f32.mrb[0].mxu0
        %2601 = vmatprep.mubr.bf16.mxu0 0
        %2602 = vmatmul.mubr.bf16.gmra.mrb[0].mxu0 %v2554
        %v2603 = vpop.f32.mrb[0].mxu0
        %v2604 = vadd.f32 0.0, %v2603
        %v2605 = vpop.f32.mrb[0].mxu0
        %v2606 = vpop.f32.mrb[0].mxu0
        %v2607 = vadd.f32 0.0, %v2606
        %v2608 = vpop.f32.mrb[0].mxu0
        %2609 = vmatprep.mubr.bf16.mxu0 0
        %2610 = vmatmul.mubr.bf16.gmra.mrb[0].mxu0 %v2555
        %v2611 = vpop.f32.mrb[0].mxu0
        %v2612 = vadd.f32 0.0, %v2611
        %v2613 = vpop.f32.mrb[0].mxu0
        %v2614 = vpop.f32.mrb[0].mxu0
        %v2615 = vadd.f32 0.0, %v2614
        %v2616 = vpop.f32.mrb[0].mxu0
        %2617 = vmatprep.mubr.bf16.mxu0 0
        %2618 = vmatmul.mubr.bf16.gmra.mrb[0].mxu0 %v2556
        %v2619 = vpop.f32.mrb[0].mxu0
        %v2620 = vadd.f32 0.0, %v2619
        %v2621 = vpop.f32.mrb[0].mxu0
        %v2622 = vpop.f32.mrb[0].mxu0
        %v2623 = vadd.f32 0.0, %v2622
        %v2624 = vpop.f32.mrb[0].mxu0
        %2625 = vdwg.mxu0
        %v2626 = vmax.f32 %v2596, 0.0
        %v2627 = vmax.f32 %v2599, 0.0
        %v2628 = vmax.f32 %v2604, 0.0
        %v2629 = vmax.f32 %v2607, 0.0
        %v2630 = vmax.f32 %v2612, 0.0
        %v2631 = vmax.f32 %v2615, 0.0
        %v2632 = vmax.f32 %v2620, 0.0
        %v2633 = vmax.f32 %v2623, 0.0
        %v2634 = vpack.c.bf16 %v2627, %v2626
        %v2635 = vpack.c.bf16 %v2629, %v2628
        %v2636 = vpack.c.bf16 %v2631, %v2630
        %v2637 = vpack.c.bf16 %v2633, %v2632
        %s2638 = scalar_lea.vmem %s2, 512
        %v2639 = vld [vmem:[%s2638] sm:$0xf]
        %v2640 = vld [vmem:[%s2638 + $0x4] sm:$0xf]
        %v2641 = vld [vmem:[%s2638 + $0x8] sm:$0xf]
        %v2642 = vld [vmem:[%s2638 + $0xc] sm:$0xf]
        %v2643 = vld [vmem:[%s2638 + $0x10] sm:$0xf]
        %v2644 = vld [vmem:[%s2638 + $0x14] sm:$0xf]
        %v2645 = vld [vmem:[%s2638 + $0x18] sm:$0xf]
        %v2646 = vld [vmem:[%s2638 + $0x1c] sm:$0xf]
        %v2647 = vld [vmem:[%s2638 + $0x20] sm:$0xf]
        %v2648 = vld [vmem:[%s2638 + $0x24] sm:$0xf]
        %v2649 = vld [vmem:[%s2638 + $0x28] sm:$0xf]
        %v2650 = vld [vmem:[%s2638 + $0x2c] sm:$0xf]
        %v2651 = vld [vmem:[%s2638 + $0x30] sm:$0xf]
        %v2652 = vld [vmem:[%s2638 + $0x34] sm:$0xf]
        %v2653 = vld [vmem:[%s2638 + $0x38] sm:$0xf]
        %v2654 = vld [vmem:[%s2638 + $0x3c] sm:$0xf]
        %v2671 = vunpack.c.l.b16 %v2639
        %v2672 = vunpack.c.l.b16 %v2640
        %v2673 = vunpack.c.l.b16 %v2641
        %v2674 = vunpack.c.l.b16 %v2642
        %v2675 = vunpack.c.l.b16 %v2643
        %v2676 = vunpack.c.l.b16 %v2644
        %v2677 = vunpack.c.l.b16 %v2645
        %v2678 = vunpack.c.l.b16 %v2646
        %v2679 = vunpack.c.l.b16 %v2647
        %v2680 = vunpack.c.l.b16 %v2648
        %v2681 = vunpack.c.l.b16 %v2649
        %v2682 = vunpack.c.l.b16 %v2650
        %v2683 = vunpack.c.l.b16 %v2651
        %v2684 = vunpack.c.l.b16 %v2652
        %v2685 = vunpack.c.l.b16 %v2653
        %v2686 = vunpack.c.l.b16 %v2654
        %v2687 = vpack.c.b16 %v2672, %v2671
        %v2688 = vpack.c.b16 %v2674, %v2673
        %v2689 = vpack.c.b16 %v2676, %v2675
        %v2690 = vpack.c.b16 %v2678, %v2677
        %v2691 = vpack.c.b16 %v2680, %v2679
        %v2692 = vpack.c.b16 %v2682, %v2681
        %v2693 = vpack.c.b16 %v2684, %v2683
        %v2694 = vpack.c.b16 %v2686, %v2685
        %2703 = vmatprep.subr.bf16.mxu0 0
        %2704 = vmatpush1.bf16.msra.mxu0 %v2687
        %2705 = vmatprep.subr.bf16.mxu0 0
        %2706 = vmatpush1.bf16.msra.mxu0 %v2688
        %2707 = vmatprep.subr.bf16.mxu0 0
        %2708 = vmatpush1.bf16.msra.mxu0 %v2689
        %2709 = vmatprep.subr.bf16.mxu0 0
        %2710 = vmatpush1.bf16.msra.mxu0 %v2690
        %2711 = vmatprep.subr.bf16.mxu0 0
        %2712 = vmatpush1.bf16.msra.mxu0 %v2691
        %2713 = vmatprep.subr.bf16.mxu0 0
        %2714 = vmatpush1.bf16.msra.mxu0 %v2692
        %2715 = vmatprep.subr.bf16.mxu0 0
        %2716 = vmatpush1.bf16.msra.mxu0 %v2693
        %2717 = vmatprep.subr.bf16.mxu0 0
        %2718 = vmatpush1.bf16.msra.mxu0 %v2694
        %2719 = vmatprep.subr.bf16.mxu0 0
        %2720 = vmatpush1.bf16.msra.mxu0 0
        %2721 = vmatprep.subr.bf16.mxu0 0
        %2722 = vmatpush1.bf16.msra.mxu0 0
        %2723 = vmatprep.subr.bf16.mxu0 0
        %2724 = vmatpush1.bf16.msra.mxu0 0
        %2725 = vmatprep.subr.bf16.mxu0 0
        %2726 = vmatpush1.bf16.msra.mxu0 0
        %2727 = vmatprep.subr.bf16.mxu0 0
        %2728 = vmatpush1.bf16.msra.mxu0 0
        %2729 = vmatprep.subr.bf16.mxu0 0
        %2730 = vmatpush1.bf16.msra.mxu0 0
        %2731 = vmatprep.subr.bf16.mxu0 0
        %2732 = vmatpush1.bf16.msra.mxu0 0
        %2733 = vmatprep.subr.bf16.mxu0 0
        %2734 = vmatpush1.bf16.msra.mxu0 0
        %2735 = vmatprep.mubr.bf16.mxu0 0
        %2736 = vmatmul.mubr.bf16.gmra.mrb[0].mxu0 %v2634
        %v2737 = vpop.f32.mrb[0].mxu0
        %v2738 = vadd.f32 0.0, %v2737
        %v2739 = vpop.f32.mrb[0].mxu0
        %v2740 = vpop.f32.mrb[0].mxu0
        %v2741 = vadd.f32 0.0, %v2740
        %v2742 = vpop.f32.mrb[0].mxu0
        %2743 = vmatprep.mubr.bf16.mxu0 0
        %2744 = vmatmul.mubr.bf16.gmra.mrb[0].mxu0 %v2635
        %v2745 = vpop.f32.mrb[0].mxu0
        %v2746 = vadd.f32 0.0, %v2745
        %v2747 = vpop.f32.mrb[0].mxu0
        %v2748 = vpop.f32.mrb[0].mxu0
        %v2749 = vadd.f32 0.0, %v2748
        %v2750 = vpop.f32.mrb[0].mxu0
        %2751 = vmatprep.mubr.bf16.mxu0 0
        %2752 = vmatmul.mubr.bf16.gmra.mrb[0].mxu0 %v2636
        %v2753 = vpop.f32.mrb[0].mxu0
        %v2754 = vadd.f32 0.0, %v2753
        %v2755 = vpop.f32.mrb[0].mxu0
        %v2756 = vpop.f32.mrb[0].mxu0
        %v2757 = vadd.f32 0.0, %v2756
        %v2758 = vpop.f32.mrb[0].mxu0
        %2759 = vmatprep.mubr.bf16.mxu0 0
        %2760 = vmatmul.mubr.bf16.gmra.mrb[0].mxu0 %v2637
        %v2761 = vpop.f32.mrb[0].mxu0
        %v2762 = vadd.f32 0.0, %v2761
        %v2763 = vpop.f32.mrb[0].mxu0
        %v2764 = vpop.f32.mrb[0].mxu0
        %v2765 = vadd.f32 0.0, %v2764
        %v2766 = vpop.f32.mrb[0].mxu0
        %2767 = vdwg.mxu0
        %v2768 = vadd.f32 %v2520, %v2738
        %v2769 = vadd.f32 %v2521, %v2741
        %v2770 = vadd.f32 %v2522, %v2746
        %v2771 = vadd.f32 %v2523, %v2749
        %v2772 = vadd.f32 %v2524, %v2754
        %v2773 = vadd.f32 %v2525, %v2757
        %v2774 = vadd.f32 %v2526, %v2762
        %v2775 = vadd.f32 %v2527, %v2765
        %v2776 = vmax.f32 %v2768, 0.0
        %v2777 = vmax.f32 %v2769, 0.0
        %v2778 = vmax.f32 %v2770, 0.0
        %v2779 = vmax.f32 %v2771, 0.0
        %v2780 = vmax.f32 %v2772, 0.0
        %v2781 = vmax.f32 %v2773, 0.0
        %v2782 = vmax.f32 %v2774, 0.0
        %v2783 = vmax.f32 %v2775, 0.0
        %2784 = vst [vmem:[%s494] sm:$0xff] %v2776
        %2785 = vst [vmem:[%s494 + $0x8] sm:$0xff] %v2777
        %2786 = vst [vmem:[%s494 + $0x10] sm:$0xff] %v2778
        %2787 = vst [vmem:[%s494 + $0x18] sm:$0xff] %v2779
        %2788 = vst [vmem:[%s494 + $0x20] sm:$0xff] %v2780
        %2789 = vst [vmem:[%s494 + $0x28] sm:$0xff] %v2781
        %2790 = vst [vmem:[%s494 + $0x30] sm:$0xff] %v2782
        %2791 = vst [vmem:[%s494 + $0x38] sm:$0xff] %v2783
        %s2792 = sand.u32 %s93, 1
        %s2793 = scalar_lea.sflag [#allocation4], %s2792
        %s2794 = sand.u32 %s93, 1
        %s2795 = smul.addr %s2794, 64
        %s2796 = scalar_lea.vmem [#allocation3], %s2795
        // Predicated region
        $region74: #{_forward_jit.1} parent=68 // pred_check
          %p2797 = pneg %p103
        $region75: #{_forward_jit.1} parent=68 // pred_check_branch
          %2799 = sbr.rel (%p2797) target = $region77
        $region76: #{_forward_jit.1} parent=68 // pred_region
          %s2800 = smul.u32 8, %s17
          %s2802 = ssub.s32 1024, 1024
          %2803 = vsyncadd %s2793, %s2802
          %s2804 = smul.addr %s2800, 128
          %s2805 = scalar_lea.hbm %s3, %s2804
          %s2806 = sshll.u32 %s2796, 4
          %s2807 = int_to_ptr.vmem [resolvable:$true] %s2806
          %2812 = dma.vmem_to_hbm [thread:$0]  %s2807, 1024, %s2805, %s2793, 128, 128, 8
        $region77: #{_forward_jit.1} parent=68 // pred_fallthru
          _
      $region69: #{_forward_jit.1} parent=5 // pred_fallthru
        _
      %p2813 = scmp.le.s32.totalorder 2, %s12
      // Predicated region
      $region78: #{_forward_jit.1} parent=5 // pred_check
        %p2814 = pneg %p2813
      $region79: #{_forward_jit.1} parent=5 // pred_check_branch
        %2816 = sbr.rel (%p2814) target = $region81
      $region80: #{_forward_jit.1} parent=5 // pred_region
        %s2817 = ssub.s32 %s12, 2
        // Predicated region
        $region82: #{_forward_jit.1} parent=80 // pred_check
          %p2818 = pneg %p109
        $region83: #{_forward_jit.1} parent=80 // pred_check_branch
          %2820 = sbr.rel (%p2818) target = $region85
        $region84: #{_forward_jit.1} parent=80 // pred_region
          %s2821 = sand.u32 %s94, 1
          %s2822 = scalar_lea.sflag [#allocation4], %s2821
          %s2823 = sand.u32 %s94, 1
          %s2824 = smul.addr %s2823, 64
          %s2825 = scalar_lea.vmem [#allocation3], %s2824
          %2826 = dma.done %s2822, 1024
        $region85: #{_forward_jit.1} parent=80 // pred_fallthru
          _
      $region81: #{_forward_jit.1} parent=5 // pred_fallthru
        _
    $region6: #{_forward_jit.1} parent=1 // loop_footer
      %s16 = sadd.s32 1, %s12
    $region7: #{_forward_jit.1} parent=1 // loop_footer_branch
      %11 = sbr.rel target = $region3
    $region8: #{_forward_jit.1} parent=1 // loop_exit
      _
    %2827 = vsyncpa [#allocation4], 1
    %s2828 = scalar_lea.sflag [#allocation4], 1
    %2829 = vsyncpa %s2828, 1

</llo_original>
